<compile_context>
chip_gen: v7x
topology: tpu7x:2x2x1
jax: 0.10.0
libtpu: 0.0.40
codegen_flags: <defaults>
</compile_context>

<pallas_src>
import functools

import jax
import jax.numpy as jnp
from jax import lax
from jax.experimental import pallas as pl
from jax.experimental.pallas import tpu as pltpu


# ---------------------------------------------------------------------------
# Pallas kernel: full sequence, 2 stacked LSTM layers + FC on last hidden.
# ---------------------------------------------------------------------------
def stock_lstm_kernel(x_ref,       # (T*Bp, I)   f32  time-major, batch padded
                      wih0_ref,    # (I, 4H)     f32  (w_ih_l0^T)
                      whh0_ref,    # (H, 4H)     f32  (w_hh_l0^T)
                      b0_ref,      # (1, 4H)     f32  (b_ih_l0 + b_hh_l0)
                      w1_ref,      # (2H, 4H)    f32  fused [w_ih_l1^T ; w_hh_l1^T]
                      b1_ref,      # (1, 4H)     f32  (b_ih_l1 + b_hh_l1)
                      fcw_ref,     # (H, O)      f32  (fc weight^T)
                      fcb_ref,     # (1, O)      f32
                      out_ref):    # (Bp, O)     f32
    TB, _ = x_ref.shape
    H = whh0_ref.shape[0]
    Bp = out_ref.shape[0]
    T = TB // Bp

    # ---- hoisted, loop-invariant loads / broadcasts (read once) ----
    whh0 = whh0_ref[...]                                   # (H, 4H)
    w1 = w1_ref[...]                                       # (2H, 4H)
    b1 = jnp.broadcast_to(b1_ref[...], (Bp, 4 * H))        # (Bp, 4H)

    # ---- layer-0 input projection for ALL timesteps in one MXU call ----
    # (removes one matmul + bias add from the per-step serial dependency chain)
    x_proj = (jnp.dot(x_ref[...], wih0_ref[...],
                      preferred_element_type=jnp.float32)
              + b0_ref[...])                               # (T*Bp, 4H)

    def cell(pre, c_prev):
        # 2 full-width EUP pushes over (Bp, 4H): with 4H = 128 lanes this is
        # exactly one vreg row per push — already vreg-optimal.
        sg = jax.nn.sigmoid(pre)
        th = jnp.tanh(pre)
        i = sg[:, 0 * H:1 * H]
        f = sg[:, 1 * H:2 * H]
        g = th[:, 2 * H:3 * H]
        o = sg[:, 3 * H:4 * H]
        c = f * c_prev + i * g
        h = o * jnp.tanh(c)
        return h, c

    zeros = jnp.zeros((Bp, H), jnp.float32)                # h0 / c0 init = 0
    h0, c0, h1, c1 = zeros, zeros, zeros, zeros

    # Static unroll over the (small, fixed) sequence length: static slice
    # indices, cross-iteration scheduling visibility, no loop overhead.
    for t in range(T):
        pre0 = (x_proj[t * Bp:(t + 1) * Bp, :]
                + jnp.dot(h0, whh0, preferred_element_type=jnp.float32))
        h0, c0 = cell(pre0, c0)
        # Fused layer-1 gates: single (Bp, 2H) x (2H, 4H) matmul.
        pre1 = (jnp.dot(jnp.concatenate([h0, h1], axis=-1), w1,
                        preferred_element_type=jnp.float32)
                + b1)
        h1, c1 = cell(pre1, c1)

    # fc(out[:, -1, :])
    out_ref[...] = (jnp.dot(h1, fcw_ref[...], preferred_element_type=jnp.float32)
                    + fcb_ref[...]).astype(out_ref.dtype)


# ---------------------------------------------------------------------------
# Wrapper: PyTorch-shaped params -> kernel layout, single pallas_call.
# ---------------------------------------------------------------------------
@jax.jit
def stock_lstm_forward(x, params):
    """x: (B, T, I) f32 (batch_first, like the PyTorch module). Returns (B, O)."""
    B, T, I = x.shape
    H = params["w_hh_l0"].shape[1]
    O = params["fc_w"].shape[0]

    # Pad batch to the f32 sublane count (8) so vregs / MXU rows are filled.
    SUB = 8
    Bp = ((B + SUB - 1) // SUB) * SUB
    Bp = max(Bp, SUB)

    x_tm = jnp.transpose(x, (1, 0, 2))                     # (T, B, I) time-major
    if Bp != B:
        x_tm = jnp.pad(x_tm, ((0, 0), (0, Bp - B), (0, 0)))
    x_flat = x_tm.reshape(T * Bp, I)                       # (T*Bp, I)

    w1_fused = jnp.concatenate(
        [params["w_ih_l1"].T, params["w_hh_l1"].T], axis=0)        # (2H, 4H)

    kernel_args = (
        x_flat,
        params["w_ih_l0"].T,                                       # (I, 4H)
        params["w_hh_l0"].T,                                       # (H, 4H)
        (params["b_ih_l0"] + params["b_hh_l0"])[None, :],          # (1, 4H)
        w1_fused,                                                  # (2H, 4H)
        (params["b_ih_l1"] + params["b_hh_l1"])[None, :],          # (1, 4H)
        params["fc_w"].T,                                          # (H, O)
        params["fc_b"][None, :],                                   # (1, O)
    )

    # Advisory cost estimate (lets XLA schedule surrounding ops around us).
    flops = (2 * T * Bp * I * 4 * H        # hoisted layer-0 input projection
             + 2 * T * Bp * H * 4 * H      # layer-0 recurrent matmul
             + 2 * T * Bp * 2 * H * 4 * H  # fused layer-1 matmul
             + 2 * Bp * H * O)             # final fc
    transcendentals = T * 2 * (2 * Bp * 4 * H + Bp * H)
    bytes_accessed = 4 * (T * Bp * I
                          + sum(int(a.size) for a in kernel_args[1:])
                          + Bp * O)

    vmem = pl.BlockSpec(memory_space=pltpu.MemorySpace.VMEM)
    out_padded = pl.pallas_call(
        stock_lstm_kernel,
        out_shape=jax.ShapeDtypeStruct((Bp, O), jnp.float32),
        in_specs=[vmem] * len(kernel_args),
        out_specs=vmem,
        cost_estimate=pl.CostEstimate(
            flops=flops,
            transcendentals=transcendentals,
            bytes_accessed=bytes_accessed),
    )(*kernel_args)
    return out_padded[:B]
    # TODO(synk): for v7x with real batches (>=16), add a leading "parallel"
    # grid axis over batch shards so both TensorCores run independent
    # recurrences; at B=2 a second core has nothing to do.


# ---------------------------------------------------------------------------
# Pure-JAX reference (mirrors torch.nn.LSTM + nn.Linear semantics).
# ---------------------------------------------------------------------------
def stock_lstm_reference(x, params):
    B, T, I = x.shape
    H = params["w_hh_l0"].shape[1]

    def layer(inp_seq, w_ih, w_hh, b_ih, b_hh):
        def step(carry, x_t):
            h, c = carry
            pre = x_t @ w_ih.T + h @ w_hh.T + b_ih + b_hh
            i = jax.nn.sigmoid(pre[:, 0 * H:1 * H])
            f = jax.nn.sigmoid(pre[:, 1 * H:2 * H])
            g = jnp.tanh(pre[:, 2 * H:3 * H])
            o = jax.nn.sigmoid(pre[:, 3 * H:4 * H])
            c = f * c + i * g
            h = o * jnp.tanh(c)
            return (h, c), h
        h0 = jnp.zeros((B, H), jnp.float32)
        (_, _), hs = lax.scan(step, (h0, h0), jnp.transpose(inp_seq, (1, 0, 2)))
        return jnp.transpose(hs, (1, 0, 2))                 # (B, T, H)

    h_l0 = layer(x, params["w_ih_l0"], params["w_hh_l0"],
                 params["b_ih_l0"], params["b_hh_l0"])
    h_l1 = layer(h_l0, params["w_ih_l1"], params["w_hh_l1"],
                 params["b_ih_l1"], params["b_hh_l1"])
    return h_l1[:, -1, :] @ params["fc_w"].T + params["fc_b"]


# ---------------------------------------------------------------------------
# Deterministic parameter init (PyTorch shapes; uniform(-1/sqrt(H), 1/sqrt(H))).
# ---------------------------------------------------------------------------
def init_params(key, input_size, hidden_size, output_size):
    H, I, O = hidden_size, input_size, output_size
    bound = 1.0 / jnp.sqrt(jnp.float32(H))
    shapes = {
        "w_ih_l0": (4 * H, I), "w_hh_l0": (4 * H, H),
        "b_ih_l0": (4 * H,),   "b_hh_l0": (4 * H,),
        "w_ih_l1": (4 * H, H), "w_hh_l1": (4 * H, H),
        "b_ih_l1": (4 * H,),   "b_hh_l1": (4 * H,),
        "fc_w": (O, H),        "fc_b": (O,),
    }
    params = {}
    for name, shape in shapes.items():
        key, sub = jax.random.split(key)
        params[name] = jax.random.uniform(sub, shape, jnp.float32, -bound, bound)
    return params


if __name__ == "__main__":
    # Small shapes consistent with the module's forward:
    #   x: (batch=2, seq=8, input_size=4), hidden_size=32, num_layers=2, output=1
    B, T, I, H, O = 2, 8, 4, 32, 1

    key = jax.random.PRNGKey(0)
    key, kx = jax.random.split(key)
    x = jax.random.normal(kx, (B, T, I), jnp.float32)
    params = init_params(key, I, H, O)

    out = stock_lstm_forward(x, params)
    out = jax.block_until_ready(out)

    ref = stock_lstm_reference(x, params)
    assert out.shape == (B, O), out.shape
    assert jnp.allclose(out, ref, atol=1e-5, rtol=1e-5), (out, ref)

    print("KERNEL_OK")
</pallas_src>

<mosaic_0001>
module attributes {stable_mosaic.version = 11 : i64} {
  func.func @stock_lstm_kernel(%arg0: memref<64x4xf32, #tpu.memory_space<vmem>>, %arg1: memref<4x128xf32, #tpu.memory_space<vmem>>, %arg2: memref<32x128xf32, #tpu.memory_space<vmem>>, %arg3: memref<1x128xf32, #tpu.memory_space<vmem>>, %arg4: memref<64x128xf32, #tpu.memory_space<vmem>>, %arg5: memref<1x128xf32, #tpu.memory_space<vmem>>, %arg6: memref<32x1xf32, #tpu.memory_space<vmem>>, %arg7: memref<1x1xf32, #tpu.memory_space<vmem>>, %arg8: memref<8x1xf32, #tpu.memory_space<vmem>>) attributes {dimension_semantics = [], scalar_prefetch = 0 : i64, scratch_operands = 0 : i64, tpu.core_type = #tpu.core_type<tc>} {
    %c0 = arith.constant 0 : index
    %c0_0 = arith.constant 0 : index
    %0 = vector.load %arg2[%c0, %c0_0] : memref<32x128xf32, #tpu.memory_space<vmem>>, vector<32x128xf32>
    %c0_1 = arith.constant 0 : index
    %c0_2 = arith.constant 0 : index
    %1 = vector.load %arg4[%c0_1, %c0_2] : memref<64x128xf32, #tpu.memory_space<vmem>>, vector<64x128xf32>
    %c0_3 = arith.constant 0 : index
    %c0_4 = arith.constant 0 : index
    %2 = vector.load %arg5[%c0_3, %c0_4] : memref<1x128xf32, #tpu.memory_space<vmem>>, vector<1x128xf32>
    %3 = vector.shape_cast %2 : vector<1x128xf32> to vector<1x128xf32>
    %4 = vector.broadcast %3 : vector<1x128xf32> to vector<8x128xf32>
    %c0_5 = arith.constant 0 : index
    %c0_6 = arith.constant 0 : index
    %5 = vector.load %arg0[%c0_5, %c0_6] : memref<64x4xf32, #tpu.memory_space<vmem>>, vector<64x4xf32>
    %c0_7 = arith.constant 0 : index
    %c0_8 = arith.constant 0 : index
    %6 = vector.load %arg1[%c0_7, %c0_8] : memref<4x128xf32, #tpu.memory_space<vmem>>, vector<4x128xf32>
    %cst = arith.constant dense<0.000000e+00> : vector<64x128xf32>
    %7 = tpu.matmul %5, %6, %cst {dimension_numbers = #tpu.dot_dimension_numbers<[1], [0], [0], [1], [0, 0, 1, 1], [], []>} : vector<64x4xf32>, vector<4x128xf32>, vector<64x128xf32> -> vector<64x128xf32>
    %c0_9 = arith.constant 0 : index
    %c0_10 = arith.constant 0 : index
    %8 = vector.load %arg3[%c0_9, %c0_10] : memref<1x128xf32, #tpu.memory_space<vmem>>, vector<1x128xf32>
    %9 = vector.broadcast %8 : vector<1x128xf32> to vector<64x128xf32>
    %10 = arith.addf %7, %9 : vector<64x128xf32>
    %cst_11 = arith.constant 0.000000e+00 : f32
    %11 = vector.broadcast %cst_11 : f32 to vector<8x32xf32>
    %12 = vector.extract_strided_slice %10 {offsets = [0, 0], sizes = [8, 128], strides = [1, 1]} : vector<64x128xf32> to vector<8x128xf32>
    %cst_12 = arith.constant dense<0.000000e+00> : vector<8x128xf32>
    %13 = tpu.matmul %11, %0, %cst_12 {dimension_numbers = #tpu.dot_dimension_numbers<[1], [0], [0], [1], [0, 0, 1, 1], [], []>} : vector<8x32xf32>, vector<32x128xf32>, vector<8x128xf32> -> vector<8x128xf32>
    %14 = arith.addf %12, %13 : vector<8x128xf32>
    %15 = arith.negf %14 : vector<8x128xf32>
    %16 = math.exp %15 : vector<8x128xf32>
    %cst_13 = arith.constant 1.000000e+00 : f32
    %17 = vector.broadcast %cst_13 : f32 to vector<8x128xf32>
    %18 = arith.addf %17, %16 : vector<8x128xf32>
    %19 = arith.divf %17, %18 : vector<8x128xf32>
    %20 = math.tanh %14 : vector<8x128xf32>
    %21 = vector.extract_strided_slice %19 {offsets = [0, 0], sizes = [8, 32], strides = [1, 1]} : vector<8x128xf32> to vector<8x32xf32>
    %22 = vector.extract_strided_slice %19 {offsets = [0, 32], sizes = [8, 32], strides = [1, 1]} : vector<8x128xf32> to vector<8x32xf32>
    %23 = vector.extract_strided_slice %20 {offsets = [0, 64], sizes = [8, 32], strides = [1, 1]} : vector<8x128xf32> to vector<8x32xf32>
    %24 = vector.extract_strided_slice %19 {offsets = [0, 96], sizes = [8, 32], strides = [1, 1]} : vector<8x128xf32> to vector<8x32xf32>
    %25 = arith.mulf %22, %11 : vector<8x32xf32>
    %26 = arith.mulf %21, %23 : vector<8x32xf32>
    %27 = arith.addf %25, %26 : vector<8x32xf32>
    %28 = math.tanh %27 : vector<8x32xf32>
    %29 = arith.mulf %24, %28 : vector<8x32xf32>
    %30 = tpu.concatenate %29, %11 in 1 : vector<8x32xf32>, vector<8x32xf32> -> vector<8x64xf32>
    %cst_14 = arith.constant dense<0.000000e+00> : vector<8x128xf32>
    %31 = tpu.matmul %30, %1, %cst_14 {dimension_numbers = #tpu.dot_dimension_numbers<[1], [0], [0], [1], [0, 0, 1, 1], [], []>} : vector<8x64xf32>, vector<64x128xf32>, vector<8x128xf32> -> vector<8x128xf32>
    %32 = arith.addf %31, %4 : vector<8x128xf32>
    %33 = arith.negf %32 : vector<8x128xf32>
    %34 = math.exp %33 : vector<8x128xf32>
    %cst_15 = arith.constant 1.000000e+00 : f32
    %35 = vector.broadcast %cst_15 : f32 to vector<8x128xf32>
    %36 = arith.addf %35, %34 : vector<8x128xf32>
    %37 = arith.divf %35, %36 : vector<8x128xf32>
    %38 = math.tanh %32 : vector<8x128xf32>
    %39 = vector.extract_strided_slice %37 {offsets = [0, 0], sizes = [8, 32], strides = [1, 1]} : vector<8x128xf32> to vector<8x32xf32>
    %40 = vector.extract_strided_slice %37 {offsets = [0, 32], sizes = [8, 32], strides = [1, 1]} : vector<8x128xf32> to vector<8x32xf32>
    %41 = vector.extract_strided_slice %38 {offsets = [0, 64], sizes = [8, 32], strides = [1, 1]} : vector<8x128xf32> to vector<8x32xf32>
    %42 = vector.extract_strided_slice %37 {offsets = [0, 96], sizes = [8, 32], strides = [1, 1]} : vector<8x128xf32> to vector<8x32xf32>
    %43 = arith.mulf %40, %11 : vector<8x32xf32>
    %44 = arith.mulf %39, %41 : vector<8x32xf32>
    %45 = arith.addf %43, %44 : vector<8x32xf32>
    %46 = math.tanh %45 : vector<8x32xf32>
    %47 = arith.mulf %42, %46 : vector<8x32xf32>
    %48 = vector.extract_strided_slice %10 {offsets = [8, 0], sizes = [8, 128], strides = [1, 1]} : vector<64x128xf32> to vector<8x128xf32>
    %cst_16 = arith.constant dense<0.000000e+00> : vector<8x128xf32>
    %49 = tpu.matmul %29, %0, %cst_16 {dimension_numbers = #tpu.dot_dimension_numbers<[1], [0], [0], [1], [0, 0, 1, 1], [], []>} : vector<8x32xf32>, vector<32x128xf32>, vector<8x128xf32> -> vector<8x128xf32>
    %50 = arith.addf %48, %49 : vector<8x128xf32>
    %51 = arith.negf %50 : vector<8x128xf32>
    %52 = math.exp %51 : vector<8x128xf32>
    %cst_17 = arith.constant 1.000000e+00 : f32
    %53 = vector.broadcast %cst_17 : f32 to vector<8x128xf32>
    %54 = arith.addf %53, %52 : vector<8x128xf32>
    %55 = arith.divf %53, %54 : vector<8x128xf32>
    %56 = math.tanh %50 : vector<8x128xf32>
    %57 = vector.extract_strided_slice %55 {offsets = [0, 0], sizes = [8, 32], strides = [1, 1]} : vector<8x128xf32> to vector<8x32xf32>
    %58 = vector.extract_strided_slice %55 {offsets = [0, 32], sizes = [8, 32], strides = [1, 1]} : vector<8x128xf32> to vector<8x32xf32>
    %59 = vector.extract_strided_slice %56 {offsets = [0, 64], sizes = [8, 32], strides = [1, 1]} : vector<8x128xf32> to vector<8x32xf32>
    %60 = vector.extract_strided_slice %55 {offsets = [0, 96], sizes = [8, 32], strides = [1, 1]} : vector<8x128xf32> to vector<8x32xf32>
    %61 = arith.mulf %58, %27 : vector<8x32xf32>
    %62 = arith.mulf %57, %59 : vector<8x32xf32>
    %63 = arith.addf %61, %62 : vector<8x32xf32>
    %64 = math.tanh %63 : vector<8x32xf32>
    %65 = arith.mulf %60, %64 : vector<8x32xf32>
    %66 = tpu.concatenate %65, %47 in 1 : vector<8x32xf32>, vector<8x32xf32> -> vector<8x64xf32>
    %cst_18 = arith.constant dense<0.000000e+00> : vector<8x128xf32>
    %67 = tpu.matmul %66, %1, %cst_18 {dimension_numbers = #tpu.dot_dimension_numbers<[1], [0], [0], [1], [0, 0, 1, 1], [], []>} : vector<8x64xf32>, vector<64x128xf32>, vector<8x128xf32> -> vector<8x128xf32>
    %68 = arith.addf %67, %4 : vector<8x128xf32>
    %69 = arith.negf %68 : vector<8x128xf32>
    %70 = math.exp %69 : vector<8x128xf32>
    %cst_19 = arith.constant 1.000000e+00 : f32
    %71 = vector.broadcast %cst_19 : f32 to vector<8x128xf32>
    %72 = arith.addf %71, %70 : vector<8x128xf32>
    %73 = arith.divf %71, %72 : vector<8x128xf32>
    %74 = math.tanh %68 : vector<8x128xf32>
    %75 = vector.extract_strided_slice %73 {offsets = [0, 0], sizes = [8, 32], strides = [1, 1]} : vector<8x128xf32> to vector<8x32xf32>
    %76 = vector.extract_strided_slice %73 {offsets = [0, 32], sizes = [8, 32], strides = [1, 1]} : vector<8x128xf32> to vector<8x32xf32>
    %77 = vector.extract_strided_slice %74 {offsets = [0, 64], sizes = [8, 32], strides = [1, 1]} : vector<8x128xf32> to vector<8x32xf32>
    %78 = vector.extract_strided_slice %73 {offsets = [0, 96], sizes = [8, 32], strides = [1, 1]} : vector<8x128xf32> to vector<8x32xf32>
    %79 = arith.mulf %76, %45 : vector<8x32xf32>
    %80 = arith.mulf %75, %77 : vector<8x32xf32>
    %81 = arith.addf %79, %80 : vector<8x32xf32>
    %82 = math.tanh %81 : vector<8x32xf32>
    %83 = arith.mulf %78, %82 : vector<8x32xf32>
    %84 = vector.extract_strided_slice %10 {offsets = [16, 0], sizes = [8, 128], strides = [1, 1]} : vector<64x128xf32> to vector<8x128xf32>
    %cst_20 = arith.constant dense<0.000000e+00> : vector<8x128xf32>
    %85 = tpu.matmul %65, %0, %cst_20 {dimension_numbers = #tpu.dot_dimension_numbers<[1], [0], [0], [1], [0, 0, 1, 1], [], []>} : vector<8x32xf32>, vector<32x128xf32>, vector<8x128xf32> -> vector<8x128xf32>
    %86 = arith.addf %84, %85 : vector<8x128xf32>
    %87 = arith.negf %86 : vector<8x128xf32>
    %88 = math.exp %87 : vector<8x128xf32>
    %cst_21 = arith.constant 1.000000e+00 : f32
    %89 = vector.broadcast %cst_21 : f32 to vector<8x128xf32>
    %90 = arith.addf %89, %88 : vector<8x128xf32>
    %91 = arith.divf %89, %90 : vector<8x128xf32>
    %92 = math.tanh %86 : vector<8x128xf32>
    %93 = vector.extract_strided_slice %91 {offsets = [0, 0], sizes = [8, 32], strides = [1, 1]} : vector<8x128xf32> to vector<8x32xf32>
    %94 = vector.extract_strided_slice %91 {offsets = [0, 32], sizes = [8, 32], strides = [1, 1]} : vector<8x128xf32> to vector<8x32xf32>
    %95 = vector.extract_strided_slice %92 {offsets = [0, 64], sizes = [8, 32], strides = [1, 1]} : vector<8x128xf32> to vector<8x32xf32>
    %96 = vector.extract_strided_slice %91 {offsets = [0, 96], sizes = [8, 32], strides = [1, 1]} : vector<8x128xf32> to vector<8x32xf32>
    %97 = arith.mulf %94, %63 : vector<8x32xf32>
    %98 = arith.mulf %93, %95 : vector<8x32xf32>
    %99 = arith.addf %97, %98 : vector<8x32xf32>
    %100 = math.tanh %99 : vector<8x32xf32>
    %101 = arith.mulf %96, %100 : vector<8x32xf32>
    %102 = tpu.concatenate %101, %83 in 1 : vector<8x32xf32>, vector<8x32xf32> -> vector<8x64xf32>
    %cst_22 = arith.constant dense<0.000000e+00> : vector<8x128xf32>
    %103 = tpu.matmul %102, %1, %cst_22 {dimension_numbers = #tpu.dot_dimension_numbers<[1], [0], [0], [1], [0, 0, 1, 1], [], []>} : vector<8x64xf32>, vector<64x128xf32>, vector<8x128xf32> -> vector<8x128xf32>
    %104 = arith.addf %103, %4 : vector<8x128xf32>
    %105 = arith.negf %104 : vector<8x128xf32>
    %106 = math.exp %105 : vector<8x128xf32>
    %cst_23 = arith.constant 1.000000e+00 : f32
    %107 = vector.broadcast %cst_23 : f32 to vector<8x128xf32>
    %108 = arith.addf %107, %106 : vector<8x128xf32>
    %109 = arith.divf %107, %108 : vector<8x128xf32>
    %110 = math.tanh %104 : vector<8x128xf32>
    %111 = vector.extract_strided_slice %109 {offsets = [0, 0], sizes = [8, 32], strides = [1, 1]} : vector<8x128xf32> to vector<8x32xf32>
    %112 = vector.extract_strided_slice %109 {offsets = [0, 32], sizes = [8, 32], strides = [1, 1]} : vector<8x128xf32> to vector<8x32xf32>
    %113 = vector.extract_strided_slice %110 {offsets = [0, 64], sizes = [8, 32], strides = [1, 1]} : vector<8x128xf32> to vector<8x32xf32>
    %114 = vector.extract_strided_slice %109 {offsets = [0, 96], sizes = [8, 32], strides = [1, 1]} : vector<8x128xf32> to vector<8x32xf32>
    %115 = arith.mulf %112, %81 : vector<8x32xf32>
    %116 = arith.mulf %111, %113 : vector<8x32xf32>
    %117 = arith.addf %115, %116 : vector<8x32xf32>
    %118 = math.tanh %117 : vector<8x32xf32>
    %119 = arith.mulf %114, %118 : vector<8x32xf32>
    %120 = vector.extract_strided_slice %10 {offsets = [24, 0], sizes = [8, 128], strides = [1, 1]} : vector<64x128xf32> to vector<8x128xf32>
    %cst_24 = arith.constant dense<0.000000e+00> : vector<8x128xf32>
    %121 = tpu.matmul %101, %0, %cst_24 {dimension_numbers = #tpu.dot_dimension_numbers<[1], [0], [0], [1], [0, 0, 1, 1], [], []>} : vector<8x32xf32>, vector<32x128xf32>, vector<8x128xf32> -> vector<8x128xf32>
    %122 = arith.addf %120, %121 : vector<8x128xf32>
    %123 = arith.negf %122 : vector<8x128xf32>
    %124 = math.exp %123 : vector<8x128xf32>
    %cst_25 = arith.constant 1.000000e+00 : f32
    %125 = vector.broadcast %cst_25 : f32 to vector<8x128xf32>
    %126 = arith.addf %125, %124 : vector<8x128xf32>
    %127 = arith.divf %125, %126 : vector<8x128xf32>
    %128 = math.tanh %122 : vector<8x128xf32>
    %129 = vector.extract_strided_slice %127 {offsets = [0, 0], sizes = [8, 32], strides = [1, 1]} : vector<8x128xf32> to vector<8x32xf32>
    %130 = vector.extract_strided_slice %127 {offsets = [0, 32], sizes = [8, 32], strides = [1, 1]} : vector<8x128xf32> to vector<8x32xf32>
    %131 = vector.extract_strided_slice %128 {offsets = [0, 64], sizes = [8, 32], strides = [1, 1]} : vector<8x128xf32> to vector<8x32xf32>
    %132 = vector.extract_strided_slice %127 {offsets = [0, 96], sizes = [8, 32], strides = [1, 1]} : vector<8x128xf32> to vector<8x32xf32>
    %133 = arith.mulf %130, %99 : vector<8x32xf32>
    %134 = arith.mulf %129, %131 : vector<8x32xf32>
    %135 = arith.addf %133, %134 : vector<8x32xf32>
    %136 = math.tanh %135 : vector<8x32xf32>
    %137 = arith.mulf %132, %136 : vector<8x32xf32>
    %138 = tpu.concatenate %137, %119 in 1 : vector<8x32xf32>, vector<8x32xf32> -> vector<8x64xf32>
    %cst_26 = arith.constant dense<0.000000e+00> : vector<8x128xf32>
    %139 = tpu.matmul %138, %1, %cst_26 {dimension_numbers = #tpu.dot_dimension_numbers<[1], [0], [0], [1], [0, 0, 1, 1], [], []>} : vector<8x64xf32>, vector<64x128xf32>, vector<8x128xf32> -> vector<8x128xf32>
    %140 = arith.addf %139, %4 : vector<8x128xf32>
    %141 = arith.negf %140 : vector<8x128xf32>
    %142 = math.exp %141 : vector<8x128xf32>
    %cst_27 = arith.constant 1.000000e+00 : f32
    %143 = vector.broadcast %cst_27 : f32 to vector<8x128xf32>
    %144 = arith.addf %143, %142 : vector<8x128xf32>
    %145 = arith.divf %143, %144 : vector<8x128xf32>
    %146 = math.tanh %140 : vector<8x128xf32>
    %147 = vector.extract_strided_slice %145 {offsets = [0, 0], sizes = [8, 32], strides = [1, 1]} : vector<8x128xf32> to vector<8x32xf32>
    %148 = vector.extract_strided_slice %145 {offsets = [0, 32], sizes = [8, 32], strides = [1, 1]} : vector<8x128xf32> to vector<8x32xf32>
    %149 = vector.extract_strided_slice %146 {offsets = [0, 64], sizes = [8, 32], strides = [1, 1]} : vector<8x128xf32> to vector<8x32xf32>
    %150 = vector.extract_strided_slice %145 {offsets = [0, 96], sizes = [8, 32], strides = [1, 1]} : vector<8x128xf32> to vector<8x32xf32>
    %151 = arith.mulf %148, %117 : vector<8x32xf32>
    %152 = arith.mulf %147, %149 : vector<8x32xf32>
    %153 = arith.addf %151, %152 : vector<8x32xf32>
    %154 = math.tanh %153 : vector<8x32xf32>
    %155 = arith.mulf %150, %154 : vector<8x32xf32>
    %156 = vector.extract_strided_slice %10 {offsets = [32, 0], sizes = [8, 128], strides = [1, 1]} : vector<64x128xf32> to vector<8x128xf32>
    %cst_28 = arith.constant dense<0.000000e+00> : vector<8x128xf32>
    %157 = tpu.matmul %137, %0, %cst_28 {dimension_numbers = #tpu.dot_dimension_numbers<[1], [0], [0], [1], [0, 0, 1, 1], [], []>} : vector<8x32xf32>, vector<32x128xf32>, vector<8x128xf32> -> vector<8x128xf32>
    %158 = arith.addf %156, %157 : vector<8x128xf32>
    %159 = arith.negf %158 : vector<8x128xf32>
    %160 = math.exp %159 : vector<8x128xf32>
    %cst_29 = arith.constant 1.000000e+00 : f32
    %161 = vector.broadcast %cst_29 : f32 to vector<8x128xf32>
    %162 = arith.addf %161, %160 : vector<8x128xf32>
    %163 = arith.divf %161, %162 : vector<8x128xf32>
    %164 = math.tanh %158 : vector<8x128xf32>
    %165 = vector.extract_strided_slice %163 {offsets = [0, 0], sizes = [8, 32], strides = [1, 1]} : vector<8x128xf32> to vector<8x32xf32>
    %166 = vector.extract_strided_slice %163 {offsets = [0, 32], sizes = [8, 32], strides = [1, 1]} : vector<8x128xf32> to vector<8x32xf32>
    %167 = vector.extract_strided_slice %164 {offsets = [0, 64], sizes = [8, 32], strides = [1, 1]} : vector<8x128xf32> to vector<8x32xf32>
    %168 = vector.extract_strided_slice %163 {offsets = [0, 96], sizes = [8, 32], strides = [1, 1]} : vector<8x128xf32> to vector<8x32xf32>
    %169 = arith.mulf %166, %135 : vector<8x32xf32>
    %170 = arith.mulf %165, %167 : vector<8x32xf32>
    %171 = arith.addf %169, %170 : vector<8x32xf32>
    %172 = math.tanh %171 : vector<8x32xf32>
    %173 = arith.mulf %168, %172 : vector<8x32xf32>
    %174 = tpu.concatenate %173, %155 in 1 : vector<8x32xf32>, vector<8x32xf32> -> vector<8x64xf32>
    %cst_30 = arith.constant dense<0.000000e+00> : vector<8x128xf32>
    %175 = tpu.matmul %174, %1, %cst_30 {dimension_numbers = #tpu.dot_dimension_numbers<[1], [0], [0], [1], [0, 0, 1, 1], [], []>} : vector<8x64xf32>, vector<64x128xf32>, vector<8x128xf32> -> vector<8x128xf32>
    %176 = arith.addf %175, %4 : vector<8x128xf32>
    %177 = arith.negf %176 : vector<8x128xf32>
    %178 = math.exp %177 : vector<8x128xf32>
    %cst_31 = arith.constant 1.000000e+00 : f32
    %179 = vector.broadcast %cst_31 : f32 to vector<8x128xf32>
    %180 = arith.addf %179, %178 : vector<8x128xf32>
    %181 = arith.divf %179, %180 : vector<8x128xf32>
    %182 = math.tanh %176 : vector<8x128xf32>
    %183 = vector.extract_strided_slice %181 {offsets = [0, 0], sizes = [8, 32], strides = [1, 1]} : vector<8x128xf32> to vector<8x32xf32>
    %184 = vector.extract_strided_slice %181 {offsets = [0, 32], sizes = [8, 32], strides = [1, 1]} : vector<8x128xf32> to vector<8x32xf32>
    %185 = vector.extract_strided_slice %182 {offsets = [0, 64], sizes = [8, 32], strides = [1, 1]} : vector<8x128xf32> to vector<8x32xf32>
    %186 = vector.extract_strided_slice %181 {offsets = [0, 96], sizes = [8, 32], strides = [1, 1]} : vector<8x128xf32> to vector<8x32xf32>
    %187 = arith.mulf %184, %153 : vector<8x32xf32>
    %188 = arith.mulf %183, %185 : vector<8x32xf32>
    %189 = arith.addf %187, %188 : vector<8x32xf32>
    %190 = math.tanh %189 : vector<8x32xf32>
    %191 = arith.mulf %186, %190 : vector<8x32xf32>
    %192 = vector.extract_strided_slice %10 {offsets = [40, 0], sizes = [8, 128], strides = [1, 1]} : vector<64x128xf32> to vector<8x128xf32>
    %cst_32 = arith.constant dense<0.000000e+00> : vector<8x128xf32>
    %193 = tpu.matmul %173, %0, %cst_32 {dimension_numbers = #tpu.dot_dimension_numbers<[1], [0], [0], [1], [0, 0, 1, 1], [], []>} : vector<8x32xf32>, vector<32x128xf32>, vector<8x128xf32> -> vector<8x128xf32>
    %194 = arith.addf %192, %193 : vector<8x128xf32>
    %195 = arith.negf %194 : vector<8x128xf32>
    %196 = math.exp %195 : vector<8x128xf32>
    %cst_33 = arith.constant 1.000000e+00 : f32
    %197 = vector.broadcast %cst_33 : f32 to vector<8x128xf32>
    %198 = arith.addf %197, %196 : vector<8x128xf32>
    %199 = arith.divf %197, %198 : vector<8x128xf32>
    %200 = math.tanh %194 : vector<8x128xf32>
    %201 = vector.extract_strided_slice %199 {offsets = [0, 0], sizes = [8, 32], strides = [1, 1]} : vector<8x128xf32> to vector<8x32xf32>
    %202 = vector.extract_strided_slice %199 {offsets = [0, 32], sizes = [8, 32], strides = [1, 1]} : vector<8x128xf32> to vector<8x32xf32>
    %203 = vector.extract_strided_slice %200 {offsets = [0, 64], sizes = [8, 32], strides = [1, 1]} : vector<8x128xf32> to vector<8x32xf32>
    %204 = vector.extract_strided_slice %199 {offsets = [0, 96], sizes = [8, 32], strides = [1, 1]} : vector<8x128xf32> to vector<8x32xf32>
    %205 = arith.mulf %202, %171 : vector<8x32xf32>
    %206 = arith.mulf %201, %203 : vector<8x32xf32>
    %207 = arith.addf %205, %206 : vector<8x32xf32>
    %208 = math.tanh %207 : vector<8x32xf32>
    %209 = arith.mulf %204, %208 : vector<8x32xf32>
    %210 = tpu.concatenate %209, %191 in 1 : vector<8x32xf32>, vector<8x32xf32> -> vector<8x64xf32>
    %cst_34 = arith.constant dense<0.000000e+00> : vector<8x128xf32>
    %211 = tpu.matmul %210, %1, %cst_34 {dimension_numbers = #tpu.dot_dimension_numbers<[1], [0], [0], [1], [0, 0, 1, 1], [], []>} : vector<8x64xf32>, vector<64x128xf32>, vector<8x128xf32> -> vector<8x128xf32>
    %212 = arith.addf %211, %4 : vector<8x128xf32>
    %213 = arith.negf %212 : vector<8x128xf32>
    %214 = math.exp %213 : vector<8x128xf32>
    %cst_35 = arith.constant 1.000000e+00 : f32
    %215 = vector.broadcast %cst_35 : f32 to vector<8x128xf32>
    %216 = arith.addf %215, %214 : vector<8x128xf32>
    %217 = arith.divf %215, %216 : vector<8x128xf32>
    %218 = math.tanh %212 : vector<8x128xf32>
    %219 = vector.extract_strided_slice %217 {offsets = [0, 0], sizes = [8, 32], strides = [1, 1]} : vector<8x128xf32> to vector<8x32xf32>
    %220 = vector.extract_strided_slice %217 {offsets = [0, 32], sizes = [8, 32], strides = [1, 1]} : vector<8x128xf32> to vector<8x32xf32>
    %221 = vector.extract_strided_slice %218 {offsets = [0, 64], sizes = [8, 32], strides = [1, 1]} : vector<8x128xf32> to vector<8x32xf32>
    %222 = vector.extract_strided_slice %217 {offsets = [0, 96], sizes = [8, 32], strides = [1, 1]} : vector<8x128xf32> to vector<8x32xf32>
    %223 = arith.mulf %220, %189 : vector<8x32xf32>
    %224 = arith.mulf %219, %221 : vector<8x32xf32>
    %225 = arith.addf %223, %224 : vector<8x32xf32>
    %226 = math.tanh %225 : vector<8x32xf32>
    %227 = arith.mulf %222, %226 : vector<8x32xf32>
    %228 = vector.extract_strided_slice %10 {offsets = [48, 0], sizes = [8, 128], strides = [1, 1]} : vector<64x128xf32> to vector<8x128xf32>
    %cst_36 = arith.constant dense<0.000000e+00> : vector<8x128xf32>
    %229 = tpu.matmul %209, %0, %cst_36 {dimension_numbers = #tpu.dot_dimension_numbers<[1], [0], [0], [1], [0, 0, 1, 1], [], []>} : vector<8x32xf32>, vector<32x128xf32>, vector<8x128xf32> -> vector<8x128xf32>
    %230 = arith.addf %228, %229 : vector<8x128xf32>
    %231 = arith.negf %230 : vector<8x128xf32>
    %232 = math.exp %231 : vector<8x128xf32>
    %cst_37 = arith.constant 1.000000e+00 : f32
    %233 = vector.broadcast %cst_37 : f32 to vector<8x128xf32>
    %234 = arith.addf %233, %232 : vector<8x128xf32>
    %235 = arith.divf %233, %234 : vector<8x128xf32>
    %236 = math.tanh %230 : vector<8x128xf32>
    %237 = vector.extract_strided_slice %235 {offsets = [0, 0], sizes = [8, 32], strides = [1, 1]} : vector<8x128xf32> to vector<8x32xf32>
    %238 = vector.extract_strided_slice %235 {offsets = [0, 32], sizes = [8, 32], strides = [1, 1]} : vector<8x128xf32> to vector<8x32xf32>
    %239 = vector.extract_strided_slice %236 {offsets = [0, 64], sizes = [8, 32], strides = [1, 1]} : vector<8x128xf32> to vector<8x32xf32>
    %240 = vector.extract_strided_slice %235 {offsets = [0, 96], sizes = [8, 32], strides = [1, 1]} : vector<8x128xf32> to vector<8x32xf32>
    %241 = arith.mulf %238, %207 : vector<8x32xf32>
    %242 = arith.mulf %237, %239 : vector<8x32xf32>
    %243 = arith.addf %241, %242 : vector<8x32xf32>
    %244 = math.tanh %243 : vector<8x32xf32>
    %245 = arith.mulf %240, %244 : vector<8x32xf32>
    %246 = tpu.concatenate %245, %227 in 1 : vector<8x32xf32>, vector<8x32xf32> -> vector<8x64xf32>
    %cst_38 = arith.constant dense<0.000000e+00> : vector<8x128xf32>
    %247 = tpu.matmul %246, %1, %cst_38 {dimension_numbers = #tpu.dot_dimension_numbers<[1], [0], [0], [1], [0, 0, 1, 1], [], []>} : vector<8x64xf32>, vector<64x128xf32>, vector<8x128xf32> -> vector<8x128xf32>
    %248 = arith.addf %247, %4 : vector<8x128xf32>
    %249 = arith.negf %248 : vector<8x128xf32>
    %250 = math.exp %249 : vector<8x128xf32>
    %cst_39 = arith.constant 1.000000e+00 : f32
    %251 = vector.broadcast %cst_39 : f32 to vector<8x128xf32>
    %252 = arith.addf %251, %250 : vector<8x128xf32>
    %253 = arith.divf %251, %252 : vector<8x128xf32>
    %254 = math.tanh %248 : vector<8x128xf32>
    %255 = vector.extract_strided_slice %253 {offsets = [0, 0], sizes = [8, 32], strides = [1, 1]} : vector<8x128xf32> to vector<8x32xf32>
    %256 = vector.extract_strided_slice %253 {offsets = [0, 32], sizes = [8, 32], strides = [1, 1]} : vector<8x128xf32> to vector<8x32xf32>
    %257 = vector.extract_strided_slice %254 {offsets = [0, 64], sizes = [8, 32], strides = [1, 1]} : vector<8x128xf32> to vector<8x32xf32>
    %258 = vector.extract_strided_slice %253 {offsets = [0, 96], sizes = [8, 32], strides = [1, 1]} : vector<8x128xf32> to vector<8x32xf32>
    %259 = arith.mulf %256, %225 : vector<8x32xf32>
    %260 = arith.mulf %255, %257 : vector<8x32xf32>
    %261 = arith.addf %259, %260 : vector<8x32xf32>
    %262 = math.tanh %261 : vector<8x32xf32>
    %263 = arith.mulf %258, %262 : vector<8x32xf32>
    %264 = vector.extract_strided_slice %10 {offsets = [56, 0], sizes = [8, 128], strides = [1, 1]} : vector<64x128xf32> to vector<8x128xf32>
    %cst_40 = arith.constant dense<0.000000e+00> : vector<8x128xf32>
    %265 = tpu.matmul %245, %0, %cst_40 {dimension_numbers = #tpu.dot_dimension_numbers<[1], [0], [0], [1], [0, 0, 1, 1], [], []>} : vector<8x32xf32>, vector<32x128xf32>, vector<8x128xf32> -> vector<8x128xf32>
    %266 = arith.addf %264, %265 : vector<8x128xf32>
    %267 = arith.negf %266 : vector<8x128xf32>
    %268 = math.exp %267 : vector<8x128xf32>
    %cst_41 = arith.constant 1.000000e+00 : f32
    %269 = vector.broadcast %cst_41 : f32 to vector<8x128xf32>
    %270 = arith.addf %269, %268 : vector<8x128xf32>
    %271 = arith.divf %269, %270 : vector<8x128xf32>
    %272 = math.tanh %266 : vector<8x128xf32>
    %273 = vector.extract_strided_slice %271 {offsets = [0, 0], sizes = [8, 32], strides = [1, 1]} : vector<8x128xf32> to vector<8x32xf32>
    %274 = vector.extract_strided_slice %271 {offsets = [0, 32], sizes = [8, 32], strides = [1, 1]} : vector<8x128xf32> to vector<8x32xf32>
    %275 = vector.extract_strided_slice %272 {offsets = [0, 64], sizes = [8, 32], strides = [1, 1]} : vector<8x128xf32> to vector<8x32xf32>
    %276 = vector.extract_strided_slice %271 {offsets = [0, 96], sizes = [8, 32], strides = [1, 1]} : vector<8x128xf32> to vector<8x32xf32>
    %277 = arith.mulf %274, %243 : vector<8x32xf32>
    %278 = arith.mulf %273, %275 : vector<8x32xf32>
    %279 = arith.addf %277, %278 : vector<8x32xf32>
    %280 = math.tanh %279 : vector<8x32xf32>
    %281 = arith.mulf %276, %280 : vector<8x32xf32>
    %282 = tpu.concatenate %281, %263 in 1 : vector<8x32xf32>, vector<8x32xf32> -> vector<8x64xf32>
    %cst_42 = arith.constant dense<0.000000e+00> : vector<8x128xf32>
    %283 = tpu.matmul %282, %1, %cst_42 {dimension_numbers = #tpu.dot_dimension_numbers<[1], [0], [0], [1], [0, 0, 1, 1], [], []>} : vector<8x64xf32>, vector<64x128xf32>, vector<8x128xf32> -> vector<8x128xf32>
    %284 = arith.addf %283, %4 : vector<8x128xf32>
    %285 = arith.negf %284 : vector<8x128xf32>
    %286 = math.exp %285 : vector<8x128xf32>
    %cst_43 = arith.constant 1.000000e+00 : f32
    %287 = vector.broadcast %cst_43 : f32 to vector<8x128xf32>
    %288 = arith.addf %287, %286 : vector<8x128xf32>
    %289 = arith.divf %287, %288 : vector<8x128xf32>
    %290 = math.tanh %284 : vector<8x128xf32>
    %291 = vector.extract_strided_slice %289 {offsets = [0, 0], sizes = [8, 32], strides = [1, 1]} : vector<8x128xf32> to vector<8x32xf32>
    %292 = vector.extract_strided_slice %289 {offsets = [0, 32], sizes = [8, 32], strides = [1, 1]} : vector<8x128xf32> to vector<8x32xf32>
    %293 = vector.extract_strided_slice %290 {offsets = [0, 64], sizes = [8, 32], strides = [1, 1]} : vector<8x128xf32> to vector<8x32xf32>
    %294 = vector.extract_strided_slice %289 {offsets = [0, 96], sizes = [8, 32], strides = [1, 1]} : vector<8x128xf32> to vector<8x32xf32>
    %295 = arith.mulf %292, %261 : vector<8x32xf32>
    %296 = arith.mulf %291, %293 : vector<8x32xf32>
    %297 = arith.addf %295, %296 : vector<8x32xf32>
    %298 = math.tanh %297 : vector<8x32xf32>
    %299 = arith.mulf %294, %298 : vector<8x32xf32>
    %c0_44 = arith.constant 0 : index
    %c0_45 = arith.constant 0 : index
    %300 = vector.load %arg6[%c0_44, %c0_45] : memref<32x1xf32, #tpu.memory_space<vmem>>, vector<32x1xf32>
    %cst_46 = arith.constant dense<0.000000e+00> : vector<8x1xf32>
    %301 = tpu.matmul %299, %300, %cst_46 {dimension_numbers = #tpu.dot_dimension_numbers<[1], [0], [0], [1], [0, 0, 1, 1], [], []>} : vector<8x32xf32>, vector<32x1xf32>, vector<8x1xf32> -> vector<8x1xf32>
    %c0_47 = arith.constant 0 : index
    %c0_48 = arith.constant 0 : index
    %302 = vector.load %arg7[%c0_47, %c0_48] : memref<1x1xf32, #tpu.memory_space<vmem>>, vector<1x1xf32>
    %303 = vector.broadcast %302 : vector<1x1xf32> to vector<8x1xf32>
    %304 = arith.addf %301, %303 : vector<8x1xf32>
    %c0_49 = arith.constant 0 : index
    %c0_50 = arith.constant 0 : index
    %305 = vector.load %arg8[%c0_49, %c0_50] : memref<8x1xf32, #tpu.memory_space<vmem>>, vector<8x1xf32>
    tpu.vector_store %arg8[%c0_49, %c0_50], %304 {strides = array<i32>} : memref<8x1xf32, #tpu.memory_space<vmem>>, vector<8x1xf32>,
    return
  }
}

</mosaic_0001>

<llo_original>
// kernel: stock_lstm_forward.1
$region0: #{stock_lstm_forward.1}
  #allocation0 [shape = 'u32[]', space=smem, size = 0x4, offset = 0x4, fixed_abs, tag = 'smem constant byte address 0x4 - core index']
  #allocation1 [shape = 'u32[144,128]{1,0:T(1,128)}', space=vmem, size = 0x12000, scoped, tag = 'internal scratch']
  #allocation2 [shape = 'f32[1,1]{1,0:T(1,128)S(1)}', space=vmem, size = 0x200, scoped, tag = 'scoped memory for stock_lstm_forward.1']
  %s0 = inlined_call_operand.vmem [shape: f32[64,4], index: 0, kind: input, shape index: {}]
  %s1 = inlined_call_operand.vmem [shape: f32[4,128], index: 1, kind: input, shape index: {}]
  %s2 = inlined_call_operand.vmem [shape: f32[32,128], index: 2, kind: input, shape index: {}]
  %s3 = inlined_call_operand.vmem [shape: f32[1,128], index: 3, kind: input, shape index: {}]
  %s4 = inlined_call_operand.vmem [shape: f32[64,128], index: 4, kind: input, shape index: {}]
  %s5 = inlined_call_operand.vmem [shape: f32[1,128], index: 5, kind: input, shape index: {}]
  %s6 = inlined_call_operand.vmem [shape: f32[32,1], index: 6, kind: input, shape index: {}]
  %s7 = inlined_call_operand.<no memory space> [shape: f32[1,1], index: 7, kind: input, shape index: {}]
  %s8 = inlined_call_operand.vmem [shape: f32[8,1], index: 8, kind: output, shape index: {}]
  %s9 = sld [smem:[#allocation0]]
  $region42: #{stock_lstm_forward.1} parent=0
    _
  %s11 = ssub.s32 1, %s9
  %s12 = scalar_select 0, %s11, %s9
  %v13 = vstv %s7
  %14 = vst [vmem:[#allocation2] sm:$0x1] %v13
  // Predicated region
  $region2: #{stock_lstm_forward.1} parent=0 // pred_check
    _
  $region3: #{stock_lstm_forward.1} parent=0 // pred_check_branch
    %16 = sbr.rel (0) target = $region5
  $region4: #{stock_lstm_forward.1} parent=0 // pred_region
    _
  $region5: #{stock_lstm_forward.1} parent=0 // pred_fallthru
    _
  // Predicated region
  $region6: #{stock_lstm_forward.1} parent=0 // pred_check
    _
  $region7: #{stock_lstm_forward.1} parent=0 // pred_check_branch
    %18 = sbr.rel (0) target = $region9
  $region8: #{stock_lstm_forward.1} parent=0 // pred_region
    _
  $region9: #{stock_lstm_forward.1} parent=0 // pred_fallthru
    _
  // Predicated region
  $region10: #{stock_lstm_forward.1} parent=0 // pred_check
    _
  $region11: #{stock_lstm_forward.1} parent=0 // pred_check_branch
    %20 = sbr.rel (0) target = $region13
  $region12: #{stock_lstm_forward.1} parent=0 // pred_region
    _
  $region13: #{stock_lstm_forward.1} parent=0 // pred_fallthru
    _
  // Predicated region
  $region14: #{stock_lstm_forward.1} parent=0 // pred_check
    _
  $region15: #{stock_lstm_forward.1} parent=0 // pred_check_branch
    %22 = sbr.rel (0) target = $region17
  $region16: #{stock_lstm_forward.1} parent=0 // pred_region
    _
  $region17: #{stock_lstm_forward.1} parent=0 // pred_fallthru
    _
  // Predicated region
  $region18: #{stock_lstm_forward.1} parent=0 // pred_check
    _
  $region19: #{stock_lstm_forward.1} parent=0 // pred_check_branch
    %24 = sbr.rel (0) target = $region21
  $region20: #{stock_lstm_forward.1} parent=0 // pred_region
    _
  $region21: #{stock_lstm_forward.1} parent=0 // pred_fallthru
    _
  // Predicated region
  $region22: #{stock_lstm_forward.1} parent=0 // pred_check
    _
  $region23: #{stock_lstm_forward.1} parent=0 // pred_check_branch
    %26 = sbr.rel (0) target = $region25
  $region24: #{stock_lstm_forward.1} parent=0 // pred_region
    _
  $region25: #{stock_lstm_forward.1} parent=0 // pred_fallthru
    _
  // Predicated region
  $region26: #{stock_lstm_forward.1} parent=0 // pred_check
    _
  $region27: #{stock_lstm_forward.1} parent=0 // pred_check_branch
    %28 = sbr.rel (0) target = $region29
  $region28: #{stock_lstm_forward.1} parent=0 // pred_region
    _
  $region29: #{stock_lstm_forward.1} parent=0 // pred_fallthru
    _
  // Predicated region
  $region30: #{stock_lstm_forward.1} parent=0 // pred_check
    _
  $region31: #{stock_lstm_forward.1} parent=0 // pred_check_branch
    %30 = sbr.rel (0) target = $region33
  $region32: #{stock_lstm_forward.1} parent=0 // pred_region
    _
  $region33: #{stock_lstm_forward.1} parent=0 // pred_fallthru
    _
  %v31 = vld [vmem:[%s2] sm:$0xff]
  %v32 = vld [vmem:[%s2 + $0x8] sm:$0xff]
  %v33 = vld [vmem:[%s2 + $0x10] sm:$0xff]
  %v34 = vld [vmem:[%s2 + $0x18] sm:$0xff]
  %v35 = vld [vmem:[%s4] sm:$0xff]
  %v36 = vld [vmem:[%s4 + $0x8] sm:$0xff]
  %v37 = vld [vmem:[%s4 + $0x10] sm:$0xff]
  %v38 = vld [vmem:[%s4 + $0x18] sm:$0xff]
  %v39 = vld [vmem:[%s4 + $0x20] sm:$0xff]
  %v40 = vld [vmem:[%s4 + $0x28] sm:$0xff]
  %v41 = vld [vmem:[%s4 + $0x30] sm:$0xff]
  %v42 = vld [vmem:[%s4 + $0x38] sm:$0xff]
  %v43 = vld [vmem:[%s5] sm:$0x1]
  %v45 = vlaneseq
  %v46 = vshrl.u32 %v45, 7
  %v47 = vsub.s32 0, %v46
  %v48 = vrot.slane %v43, %v47
  %v50 = vld [vmem:[%s0] sm:$0xff]
  %v51 = vld [vmem:[%s0 + $0x8] sm:$0xff]
  %v52 = vld [vmem:[%s0 + $0x10] sm:$0xff]
  %v53 = vld [vmem:[%s0 + $0x18] sm:$0xff]
  %v54 = vld [vmem:[%s0 + $0x20] sm:$0xff]
  %v55 = vld [vmem:[%s0 + $0x28] sm:$0xff]
  %v56 = vld [vmem:[%s0 + $0x30] sm:$0xff]
  %v57 = vld [vmem:[%s0 + $0x38] sm:$0xff]
  %v58 = vld [vmem:[%s1] sm:$0xf]
  %v59 = vld [vmem:[%s3] sm:$0x1]
  %v61 = vlaneseq
  %v62 = vshrl.u32 %v61, 7
  %v63 = vsub.s32 0, %v62
  %v64 = vrot.slane %v59, %v63
  %vm66 = vcmask 31744
  %v68 = vsel %vm66, %v50, 0
  %v71 = vsel %vm66, %v51, 0
  %v74 = vsel %vm66, %v52, 0
  %v77 = vsel %vm66, %v53, 0
  %v80 = vsel %vm66, %v54, 0
  %v83 = vsel %vm66, %v55, 0
  %v86 = vsel %vm66, %v56, 0
  %v89 = vsel %vm66, %v57, 0
  %vm91 = vcmask 1043456
  %v93 = vsel %vm91, %v58, 0
  %95 = vmatprep.subr.mxu0 0.0
  %96 = vmatpush1.msra.mxu0 %v93
  %97 = vmatprep.subr.mxu0 0.0
  %98 = vmatpush1.msra.mxu0 0.0
  %99 = vmatprep.subr.mxu0 0.0
  %100 = vmatpush1.msra.mxu0 0.0
  %101 = vmatprep.subr.mxu0 0.0
  %102 = vmatpush1.msra.mxu0 0.0
  %103 = vmatprep.subr.mxu0 0.0
  %104 = vmatpush1.msra.mxu0 0.0
  %105 = vmatprep.subr.mxu0 0.0
  %106 = vmatpush1.msra.mxu0 0.0
  %107 = vmatprep.subr.mxu0 0.0
  %108 = vmatpush1.msra.mxu0 0.0
  %109 = vmatprep.subr.mxu0 0.0
  %110 = vmatpush1.msra.mxu0 0.0
  %111 = vmatprep.subr.mxu0 0.0
  %112 = vmatpush1.msra.mxu0 0.0
  %113 = vmatprep.subr.mxu0 0.0
  %114 = vmatpush1.msra.mxu0 0.0
  %115 = vmatprep.subr.mxu0 0.0
  %116 = vmatpush1.msra.mxu0 0.0
  %117 = vmatprep.subr.mxu0 0.0
  %118 = vmatpush1.msra.mxu0 0.0
  %119 = vmatprep.subr.mxu0 0.0
  %120 = vmatpush1.msra.mxu0 0.0
  %121 = vmatprep.subr.mxu0 0.0
  %122 = vmatpush1.msra.mxu0 0.0
  %123 = vmatprep.subr.mxu0 0.0
  %124 = vmatpush1.msra.mxu0 0.0
  %125 = vmatprep.subr.mxu0 0.0
  %126 = vmatpush1.msra.mxu0 0.0
  %127 = vmatprep.subr.mxu0 0.0
  %128 = vmatpush1.msra.mxu0 0.0
  %129 = vmatprep.subr.mxu0 0.0
  %130 = vmatpush1.msra.mxu0 0.0
  %131 = vmatprep.subr.mxu0 0.0
  %132 = vmatpush1.msra.mxu0 0.0
  %133 = vmatprep.subr.mxu0 0.0
  %134 = vmatpush1.msra.mxu0 0.0
  %135 = vmatprep.subr.mxu0 0.0
  %136 = vmatpush1.msra.mxu0 0.0
  %137 = vmatprep.subr.mxu0 0.0
  %138 = vmatpush1.msra.mxu0 0.0
  %139 = vmatprep.subr.mxu0 0.0
  %140 = vmatpush1.msra.mxu0 0.0
  %141 = vmatprep.subr.mxu0 0.0
  %142 = vmatpush1.msra.mxu0 0.0
  %143 = vmatprep.subr.mxu0 0.0
  %144 = vmatpush1.msra.mxu0 0.0
  %145 = vmatprep.subr.mxu0 0.0
  %146 = vmatpush1.msra.mxu0 0.0
  %147 = vmatprep.subr.mxu0 0.0
  %148 = vmatpush1.msra.mxu0 0.0
  %149 = vmatprep.subr.mxu0 0.0
  %150 = vmatpush1.msra.mxu0 0.0
  %151 = vmatprep.subr.mxu0 0.0
  %152 = vmatpush1.msra.mxu0 0.0
  %153 = vmatprep.subr.mxu0 0.0
  %154 = vmatpush1.msra.mxu0 0.0
  %155 = vmatprep.subr.mxu0 0.0
  %156 = vmatpush1.msra.mxu0 0.0
  %157 = vmatprep.subr.mxu0 0.0
  %158 = vmatpush1.msra.mxu0 0.0
  %159 = vmatprep.mubr.f32.mxu0 0.0
  %160 = vmatmul.mubr.f32.gmra.mrb[0].mxu0 %v68
  %v161 = vpop.f32.mrb[0].mxu0
  %v162 = vadd.f32 %v64, %v161
  %v163 = vpop.f32.mrb[0].mxu0
  %164 = vmatprep.mubr.f32.mxu0 0.0
  %165 = vmatmul.mubr.f32.gmra.mrb[0].mxu0 %v71
  %v166 = vpop.f32.mrb[0].mxu0
  %v167 = vadd.f32 %v64, %v166
  %v168 = vpop.f32.mrb[0].mxu0
  %169 = vmatprep.mubr.f32.mxu0 0.0
  %170 = vmatmul.mubr.f32.gmra.mrb[0].mxu0 %v74
  %v171 = vpop.f32.mrb[0].mxu0
  %v172 = vadd.f32 %v64, %v171
  %v173 = vpop.f32.mrb[0].mxu0
  %174 = vmatprep.mubr.f32.mxu0 0.0
  %175 = vmatmul.mubr.f32.gmra.mrb[0].mxu0 %v77
  %v176 = vpop.f32.mrb[0].mxu0
  %v177 = vadd.f32 %v64, %v176
  %v178 = vpop.f32.mrb[0].mxu0
  %179 = vmatprep.mubr.f32.mxu0 0.0
  %180 = vmatmul.mubr.f32.gmra.mrb[0].mxu0 %v80
  %v181 = vpop.f32.mrb[0].mxu0
  %v182 = vadd.f32 %v64, %v181
  %v183 = vpop.f32.mrb[0].mxu0
  %184 = vmatprep.mubr.f32.mxu0 0.0
  %185 = vmatmul.mubr.f32.gmra.mrb[0].mxu0 %v83
  %v186 = vpop.f32.mrb[0].mxu0
  %v187 = vadd.f32 %v64, %v186
  %v188 = vpop.f32.mrb[0].mxu0
  %189 = vmatprep.mubr.f32.mxu0 0.0
  %190 = vmatmul.mubr.f32.gmra.mrb[0].mxu0 %v86
  %v191 = vpop.f32.mrb[0].mxu0
  %v192 = vadd.f32 %v64, %v191
  %v193 = vpop.f32.mrb[0].mxu0
  %194 = vmatprep.mubr.f32.mxu0 0.0
  %195 = vmatmul.mubr.f32.gmra.mrb[0].mxu0 %v89
  %v196 = vpop.f32.mrb[0].mxu0
  %v197 = vadd.f32 %v64, %v196
  %v198 = vpop.f32.mrb[0].mxu0
  %199 = vdwg.mxu0
  %vm200 = vcmask 261120
  %v202 = vsel %vm200, 0.0, 0
  %204 = vmatprep.subr.mxu0 0.0
  %205 = vmatpush1.msra.mxu0 %v31
  %206 = vmatprep.subr.mxu0 0.0
  %207 = vmatpush1.msra.mxu0 %v32
  %208 = vmatprep.subr.mxu0 0.0
  %209 = vmatpush1.msra.mxu0 %v33
  %210 = vmatprep.subr.mxu0 0.0
  %211 = vmatpush1.msra.mxu0 %v34
  %212 = vmatprep.subr.mxu0 0.0
  %213 = vmatpush1.msra.mxu0 0.0
  %214 = vmatprep.subr.mxu0 0.0
  %215 = vmatpush1.msra.mxu0 0.0
  %216 = vmatprep.subr.mxu0 0.0
  %217 = vmatpush1.msra.mxu0 0.0
  %218 = vmatprep.subr.mxu0 0.0
  %219 = vmatpush1.msra.mxu0 0.0
  %220 = vmatprep.subr.mxu0 0.0
  %221 = vmatpush1.msra.mxu0 0.0
  %222 = vmatprep.subr.mxu0 0.0
  %223 = vmatpush1.msra.mxu0 0.0
  %224 = vmatprep.subr.mxu0 0.0
  %225 = vmatpush1.msra.mxu0 0.0
  %226 = vmatprep.subr.mxu0 0.0
  %227 = vmatpush1.msra.mxu0 0.0
  %228 = vmatprep.subr.mxu0 0.0
  %229 = vmatpush1.msra.mxu0 0.0
  %230 = vmatprep.subr.mxu0 0.0
  %231 = vmatpush1.msra.mxu0 0.0
  %232 = vmatprep.subr.mxu0 0.0
  %233 = vmatpush1.msra.mxu0 0.0
  %234 = vmatprep.subr.mxu0 0.0
  %235 = vmatpush1.msra.mxu0 0.0
  %236 = vmatprep.subr.mxu0 0.0
  %237 = vmatpush1.msra.mxu0 0.0
  %238 = vmatprep.subr.mxu0 0.0
  %239 = vmatpush1.msra.mxu0 0.0
  %240 = vmatprep.subr.mxu0 0.0
  %241 = vmatpush1.msra.mxu0 0.0
  %242 = vmatprep.subr.mxu0 0.0
  %243 = vmatpush1.msra.mxu0 0.0
  %244 = vmatprep.subr.mxu0 0.0
  %245 = vmatpush1.msra.mxu0 0.0
  %246 = vmatprep.subr.mxu0 0.0
  %247 = vmatpush1.msra.mxu0 0.0
  %248 = vmatprep.subr.mxu0 0.0
  %249 = vmatpush1.msra.mxu0 0.0
  %250 = vmatprep.subr.mxu0 0.0
  %251 = vmatpush1.msra.mxu0 0.0
  %252 = vmatprep.subr.mxu0 0.0
  %253 = vmatpush1.msra.mxu0 0.0
  %254 = vmatprep.subr.mxu0 0.0
  %255 = vmatpush1.msra.mxu0 0.0
  %256 = vmatprep.subr.mxu0 0.0
  %257 = vmatpush1.msra.mxu0 0.0
  %258 = vmatprep.subr.mxu0 0.0
  %259 = vmatpush1.msra.mxu0 0.0
  %260 = vmatprep.subr.mxu0 0.0
  %261 = vmatpush1.msra.mxu0 0.0
  %262 = vmatprep.subr.mxu0 0.0
  %263 = vmatpush1.msra.mxu0 0.0
  %264 = vmatprep.subr.mxu0 0.0
  %265 = vmatpush1.msra.mxu0 0.0
  %266 = vmatprep.subr.mxu0 0.0
  %267 = vmatpush1.msra.mxu0 0.0
  %268 = vmatprep.mubr.f32.mxu0 0.0
  %269 = vmatmul.mubr.f32.gmra.mrb[0].mxu0 %v202
  %v270 = vpop.f32.mrb[0].mxu0
  %v271 = vadd.f32 0.0, %v270
  %v272 = vpop.f32.mrb[0].mxu0
  %273 = vdwg.mxu0
  %v274 = vadd.f32 %v162, %v271
  %v275 = vxor.u32 %v274, 2147483648
  %v276 = vmul.f32 %v275, 1.442695
  %v277 = vpow.pop %v276
  %v278 = vadd.f32 %v277, 1.0
  %v279 = vrcp.pop %v278
  %v280 = vmul.f32 1.0, %v279
  %v281 = vtanh.pop %v274
  %v282 = vmul.f32 %v280, 0.0
  %284 = vrot.lane.b32.xlu0 %v281, 64
  %v285 = vpop.permute.xlu0 %284
  %v287 = vmul.f32 %v280, %v285
  %289 = vrot.lane.b32.xlu0 %v287, 32
  %v290 = vpop.permute.xlu0 %289
  %v292 = vadd.f32 %v282, %v290
  %v293 = vtanh.pop %v292
  %295 = vrot.lane.b32.xlu0 %v293, 64
  %v296 = vpop.permute.xlu0 %295
  %v298 = vmul.f32 %v280, %v296
  %300 = vrot.lane.b32.xlu0 %v298, 32
  %v301 = vpop.permute.xlu0 %300
  %v303 = vsel %vm200, %v301, 0.0
  %vm304 = vcmask 523264
  %v306 = vsel %vm304, %v303, 0
  %308 = vmatprep.subr.mxu0 0.0
  %309 = vmatpush1.msra.mxu0 %v35
  %310 = vmatprep.subr.mxu0 0.0
  %311 = vmatpush1.msra.mxu0 %v36
  %312 = vmatprep.subr.mxu0 0.0
  %313 = vmatpush1.msra.mxu0 %v37
  %314 = vmatprep.subr.mxu0 0.0
  %315 = vmatpush1.msra.mxu0 %v38
  %316 = vmatprep.subr.mxu0 0.0
  %317 = vmatpush1.msra.mxu0 %v39
  %318 = vmatprep.subr.mxu0 0.0
  %319 = vmatpush1.msra.mxu0 %v40
  %320 = vmatprep.subr.mxu0 0.0
  %321 = vmatpush1.msra.mxu0 %v41
  %322 = vmatprep.subr.mxu0 0.0
  %323 = vmatpush1.msra.mxu0 %v42
  %324 = vmatprep.subr.mxu0 0.0
  %325 = vmatpush1.msra.mxu0 0.0
  %326 = vmatprep.subr.mxu0 0.0
  %327 = vmatpush1.msra.mxu0 0.0
  %328 = vmatprep.subr.mxu0 0.0
  %329 = vmatpush1.msra.mxu0 0.0
  %330 = vmatprep.subr.mxu0 0.0
  %331 = vmatpush1.msra.mxu0 0.0
  %332 = vmatprep.subr.mxu0 0.0
  %333 = vmatpush1.msra.mxu0 0.0
  %334 = vmatprep.subr.mxu0 0.0
  %335 = vmatpush1.msra.mxu0 0.0
  %336 = vmatprep.subr.mxu0 0.0
  %337 = vmatpush1.msra.mxu0 0.0
  %338 = vmatprep.subr.mxu0 0.0
  %339 = vmatpush1.msra.mxu0 0.0
  %340 = vmatprep.subr.mxu0 0.0
  %341 = vmatpush1.msra.mxu0 0.0
  %342 = vmatprep.subr.mxu0 0.0
  %343 = vmatpush1.msra.mxu0 0.0
  %344 = vmatprep.subr.mxu0 0.0
  %345 = vmatpush1.msra.mxu0 0.0
  %346 = vmatprep.subr.mxu0 0.0
  %347 = vmatpush1.msra.mxu0 0.0
  %348 = vmatprep.subr.mxu0 0.0
  %349 = vmatpush1.msra.mxu0 0.0
  %350 = vmatprep.subr.mxu0 0.0
  %351 = vmatpush1.msra.mxu0 0.0
  %352 = vmatprep.subr.mxu0 0.0
  %353 = vmatpush1.msra.mxu0 0.0
  %354 = vmatprep.subr.mxu0 0.0
  %355 = vmatpush1.msra.mxu0 0.0
  %356 = vmatprep.subr.mxu0 0.0
  %357 = vmatpush1.msra.mxu0 0.0
  %358 = vmatprep.subr.mxu0 0.0
  %359 = vmatpush1.msra.mxu0 0.0
  %360 = vmatprep.subr.mxu0 0.0
  %361 = vmatpush1.msra.mxu0 0.0
  %362 = vmatprep.subr.mxu0 0.0
  %363 = vmatpush1.msra.mxu0 0.0
  %364 = vmatprep.subr.mxu0 0.0
  %365 = vmatpush1.msra.mxu0 0.0
  %366 = vmatprep.subr.mxu0 0.0
  %367 = vmatpush1.msra.mxu0 0.0
  %368 = vmatprep.subr.mxu0 0.0
  %369 = vmatpush1.msra.mxu0 0.0
  %370 = vmatprep.subr.mxu0 0.0
  %371 = vmatpush1.msra.mxu0 0.0
  %372 = vmatprep.mubr.f32.mxu0 0.0
  %373 = vmatmul.mubr.f32.gmra.mrb[0].mxu0 %v306
  %v374 = vpop.f32.mrb[0].mxu0
  %v375 = vadd.f32 %v48, %v374
  %v376 = vpop.f32.mrb[0].mxu0
  %377 = vdwg.mxu0
  %v378 = vxor.u32 %v375, 2147483648
  %v379 = vmul.f32 %v378, 1.442695
  %v380 = vpow.pop %v379
  %v381 = vadd.f32 %v380, 1.0
  %v382 = vrcp.pop %v381
  %v383 = vmul.f32 1.0, %v382
  %v384 = vtanh.pop %v375
  %v385 = vmul.f32 %v383, 0.0
  %387 = vrot.lane.b32.xlu0 %v384, 64
  %v388 = vpop.permute.xlu0 %387
  %v390 = vmul.f32 %v383, %v388
  %392 = vrot.lane.b32.xlu0 %v390, 32
  %v393 = vpop.permute.xlu0 %392
  %v395 = vadd.f32 %v385, %v393
  %v396 = vtanh.pop %v395
  %398 = vrot.lane.b32.xlu0 %v396, 64
  %v399 = vpop.permute.xlu0 %398
  %v401 = vmul.f32 %v383, %v399
  %v402 = vsel %vm200, %v301, 0
  %404 = vmatprep.subr.mxu0 0.0
  %405 = vmatpush1.msra.mxu0 %v31
  %406 = vmatprep.subr.mxu0 0.0
  %407 = vmatpush1.msra.mxu0 %v32
  %408 = vmatprep.subr.mxu0 0.0
  %409 = vmatpush1.msra.mxu0 %v33
  %410 = vmatprep.subr.mxu0 0.0
  %411 = vmatpush1.msra.mxu0 %v34
  %412 = vmatprep.subr.mxu0 0.0
  %413 = vmatpush1.msra.mxu0 0.0
  %414 = vmatprep.subr.mxu0 0.0
  %415 = vmatpush1.msra.mxu0 0.0
  %416 = vmatprep.subr.mxu0 0.0
  %417 = vmatpush1.msra.mxu0 0.0
  %418 = vmatprep.subr.mxu0 0.0
  %419 = vmatpush1.msra.mxu0 0.0
  %420 = vmatprep.subr.mxu0 0.0
  %421 = vmatpush1.msra.mxu0 0.0
  %422 = vmatprep.subr.mxu0 0.0
  %423 = vmatpush1.msra.mxu0 0.0
  %424 = vmatprep.subr.mxu0 0.0
  %425 = vmatpush1.msra.mxu0 0.0
  %426 = vmatprep.subr.mxu0 0.0
  %427 = vmatpush1.msra.mxu0 0.0
  %428 = vmatprep.subr.mxu0 0.0
  %429 = vmatpush1.msra.mxu0 0.0
  %430 = vmatprep.subr.mxu0 0.0
  %431 = vmatpush1.msra.mxu0 0.0
  %432 = vmatprep.subr.mxu0 0.0
  %433 = vmatpush1.msra.mxu0 0.0
  %434 = vmatprep.subr.mxu0 0.0
  %435 = vmatpush1.msra.mxu0 0.0
  %436 = vmatprep.subr.mxu0 0.0
  %437 = vmatpush1.msra.mxu0 0.0
  %438 = vmatprep.subr.mxu0 0.0
  %439 = vmatpush1.msra.mxu0 0.0
  %440 = vmatprep.subr.mxu0 0.0
  %441 = vmatpush1.msra.mxu0 0.0
  %442 = vmatprep.subr.mxu0 0.0
  %443 = vmatpush1.msra.mxu0 0.0
  %444 = vmatprep.subr.mxu0 0.0
  %445 = vmatpush1.msra.mxu0 0.0
  %446 = vmatprep.subr.mxu0 0.0
  %447 = vmatpush1.msra.mxu0 0.0
  %448 = vmatprep.subr.mxu0 0.0
  %449 = vmatpush1.msra.mxu0 0.0
  %450 = vmatprep.subr.mxu0 0.0
  %451 = vmatpush1.msra.mxu0 0.0
  %452 = vmatprep.subr.mxu0 0.0
  %453 = vmatpush1.msra.mxu0 0.0
  %454 = vmatprep.subr.mxu0 0.0
  %455 = vmatpush1.msra.mxu0 0.0
  %456 = vmatprep.subr.mxu0 0.0
  %457 = vmatpush1.msra.mxu0 0.0
  %458 = vmatprep.subr.mxu0 0.0
  %459 = vmatpush1.msra.mxu0 0.0
  %460 = vmatprep.subr.mxu0 0.0
  %461 = vmatpush1.msra.mxu0 0.0
  %462 = vmatprep.subr.mxu0 0.0
  %463 = vmatpush1.msra.mxu0 0.0
  %464 = vmatprep.subr.mxu0 0.0
  %465 = vmatpush1.msra.mxu0 0.0
  %466 = vmatprep.subr.mxu0 0.0
  %467 = vmatpush1.msra.mxu0 0.0
  %468 = vmatprep.mubr.f32.mxu0 0.0
  %469 = vmatmul.mubr.f32.gmra.mrb[0].mxu0 %v402
  %v470 = vpop.f32.mrb[0].mxu0
  %v471 = vadd.f32 0.0, %v470
  %v472 = vpop.f32.mrb[0].mxu0
  %473 = vdwg.mxu0
  %v474 = vadd.f32 %v167, %v471
  %v475 = vxor.u32 %v474, 2147483648
  %v476 = vmul.f32 %v475, 1.442695
  %v477 = vpow.pop %v476
  %v478 = vadd.f32 %v477, 1.0
  %v479 = vrcp.pop %v478
  %v480 = vmul.f32 1.0, %v479
  %v481 = vtanh.pop %v474
  %v482 = vmul.f32 %v480, %v292
  %484 = vrot.lane.b32.xlu0 %v481, 64
  %v485 = vpop.permute.xlu0 %484
  %v487 = vmul.f32 %v480, %v485
  %489 = vrot.lane.b32.xlu0 %v487, 32
  %v490 = vpop.permute.xlu0 %489
  %v492 = vadd.f32 %v482, %v490
  %v493 = vtanh.pop %v492
  %495 = vrot.lane.b32.xlu0 %v493, 64
  %v496 = vpop.permute.xlu0 %495
  %v498 = vmul.f32 %v480, %v496
  %500 = vrot.lane.b32.xlu0 %v498, 32
  %v501 = vpop.permute.xlu0 %500
  %504 = vrot.lane.b32.xlu0 %v401, 64
  %v505 = vpop.permute.xlu0 %504
  %v507 = vsel %vm200, %v501, %v505
  %v509 = vsel %vm304, %v507, 0
  %511 = vmatprep.subr.mxu0 0.0
  %512 = vmatpush1.msra.mxu0 %v35
  %513 = vmatprep.subr.mxu0 0.0
  %514 = vmatpush1.msra.mxu0 %v36
  %515 = vmatprep.subr.mxu0 0.0
  %516 = vmatpush1.msra.mxu0 %v37
  %517 = vmatprep.subr.mxu0 0.0
  %518 = vmatpush1.msra.mxu0 %v38
  %519 = vmatprep.subr.mxu0 0.0
  %520 = vmatpush1.msra.mxu0 %v39
  %521 = vmatprep.subr.mxu0 0.0
  %522 = vmatpush1.msra.mxu0 %v40
  %523 = vmatprep.subr.mxu0 0.0
  %524 = vmatpush1.msra.mxu0 %v41
  %525 = vmatprep.subr.mxu0 0.0
  %526 = vmatpush1.msra.mxu0 %v42
  %527 = vmatprep.subr.mxu0 0.0
  %528 = vmatpush1.msra.mxu0 0.0
  %529 = vmatprep.subr.mxu0 0.0
  %530 = vmatpush1.msra.mxu0 0.0
  %531 = vmatprep.subr.mxu0 0.0
  %532 = vmatpush1.msra.mxu0 0.0
  %533 = vmatprep.subr.mxu0 0.0
  %534 = vmatpush1.msra.mxu0 0.0
  %535 = vmatprep.subr.mxu0 0.0
  %536 = vmatpush1.msra.mxu0 0.0
  %537 = vmatprep.subr.mxu0 0.0
  %538 = vmatpush1.msra.mxu0 0.0
  %539 = vmatprep.subr.mxu0 0.0
  %540 = vmatpush1.msra.mxu0 0.0
  %541 = vmatprep.subr.mxu0 0.0
  %542 = vmatpush1.msra.mxu0 0.0
  %543 = vmatprep.subr.mxu0 0.0
  %544 = vmatpush1.msra.mxu0 0.0
  %545 = vmatprep.subr.mxu0 0.0
  %546 = vmatpush1.msra.mxu0 0.0
  %547 = vmatprep.subr.mxu0 0.0
  %548 = vmatpush1.msra.mxu0 0.0
  %549 = vmatprep.subr.mxu0 0.0
  %550 = vmatpush1.msra.mxu0 0.0
  %551 = vmatprep.subr.mxu0 0.0
  %552 = vmatpush1.msra.mxu0 0.0
  %553 = vmatprep.subr.mxu0 0.0
  %554 = vmatpush1.msra.mxu0 0.0
  %555 = vmatprep.subr.mxu0 0.0
  %556 = vmatpush1.msra.mxu0 0.0
  %557 = vmatprep.subr.mxu0 0.0
  %558 = vmatpush1.msra.mxu0 0.0
  %559 = vmatprep.subr.mxu0 0.0
  %560 = vmatpush1.msra.mxu0 0.0
  %561 = vmatprep.subr.mxu0 0.0
  %562 = vmatpush1.msra.mxu0 0.0
  %563 = vmatprep.subr.mxu0 0.0
  %564 = vmatpush1.msra.mxu0 0.0
  %565 = vmatprep.subr.mxu0 0.0
  %566 = vmatpush1.msra.mxu0 0.0
  %567 = vmatprep.subr.mxu0 0.0
  %568 = vmatpush1.msra.mxu0 0.0
  %569 = vmatprep.subr.mxu0 0.0
  %570 = vmatpush1.msra.mxu0 0.0
  %571 = vmatprep.subr.mxu0 0.0
  %572 = vmatpush1.msra.mxu0 0.0
  %573 = vmatprep.subr.mxu0 0.0
  %574 = vmatpush1.msra.mxu0 0.0
  %575 = vmatprep.mubr.f32.mxu0 0.0
  %576 = vmatmul.mubr.f32.gmra.mrb[0].mxu0 %v509
  %v577 = vpop.f32.mrb[0].mxu0
  %v578 = vadd.f32 %v48, %v577
  %v579 = vpop.f32.mrb[0].mxu0
  %580 = vdwg.mxu0
  %v581 = vxor.u32 %v578, 2147483648
  %v582 = vmul.f32 %v581, 1.442695
  %v583 = vpow.pop %v582
  %v584 = vadd.f32 %v583, 1.0
  %v585 = vrcp.pop %v584
  %v586 = vmul.f32 1.0, %v585
  %v587 = vtanh.pop %v578
  %v588 = vmul.f32 %v586, %v395
  %590 = vrot.lane.b32.xlu0 %v587, 64
  %v591 = vpop.permute.xlu0 %590
  %v593 = vmul.f32 %v586, %v591
  %595 = vrot.lane.b32.xlu0 %v593, 32
  %v596 = vpop.permute.xlu0 %595
  %v598 = vadd.f32 %v588, %v596
  %v599 = vtanh.pop %v598
  %601 = vrot.lane.b32.xlu0 %v599, 64
  %v602 = vpop.permute.xlu0 %601
  %v604 = vmul.f32 %v586, %v602
  %v605 = vsel %vm200, %v501, 0
  %607 = vmatprep.subr.mxu0 0.0
  %608 = vmatpush1.msra.mxu0 %v31
  %609 = vmatprep.subr.mxu0 0.0
  %610 = vmatpush1.msra.mxu0 %v32
  %611 = vmatprep.subr.mxu0 0.0
  %612 = vmatpush1.msra.mxu0 %v33
  %613 = vmatprep.subr.mxu0 0.0
  %614 = vmatpush1.msra.mxu0 %v34
  %615 = vmatprep.subr.mxu0 0.0
  %616 = vmatpush1.msra.mxu0 0.0
  %617 = vmatprep.subr.mxu0 0.0
  %618 = vmatpush1.msra.mxu0 0.0
  %619 = vmatprep.subr.mxu0 0.0
  %620 = vmatpush1.msra.mxu0 0.0
  %621 = vmatprep.subr.mxu0 0.0
  %622 = vmatpush1.msra.mxu0 0.0
  %623 = vmatprep.subr.mxu0 0.0
  %624 = vmatpush1.msra.mxu0 0.0
  %625 = vmatprep.subr.mxu0 0.0
  %626 = vmatpush1.msra.mxu0 0.0
  %627 = vmatprep.subr.mxu0 0.0
  %628 = vmatpush1.msra.mxu0 0.0
  %629 = vmatprep.subr.mxu0 0.0
  %630 = vmatpush1.msra.mxu0 0.0
  %631 = vmatprep.subr.mxu0 0.0
  %632 = vmatpush1.msra.mxu0 0.0
  %633 = vmatprep.subr.mxu0 0.0
  %634 = vmatpush1.msra.mxu0 0.0
  %635 = vmatprep.subr.mxu0 0.0
  %636 = vmatpush1.msra.mxu0 0.0
  %637 = vmatprep.subr.mxu0 0.0
  %638 = vmatpush1.msra.mxu0 0.0
  %639 = vmatprep.subr.mxu0 0.0
  %640 = vmatpush1.msra.mxu0 0.0
  %641 = vmatprep.subr.mxu0 0.0
  %642 = vmatpush1.msra.mxu0 0.0
  %643 = vmatprep.subr.mxu0 0.0
  %644 = vmatpush1.msra.mxu0 0.0
  %645 = vmatprep.subr.mxu0 0.0
  %646 = vmatpush1.msra.mxu0 0.0
  %647 = vmatprep.subr.mxu0 0.0
  %648 = vmatpush1.msra.mxu0 0.0
  %649 = vmatprep.subr.mxu0 0.0
  %650 = vmatpush1.msra.mxu0 0.0
  %651 = vmatprep.subr.mxu0 0.0
  %652 = vmatpush1.msra.mxu0 0.0
  %653 = vmatprep.subr.mxu0 0.0
  %654 = vmatpush1.msra.mxu0 0.0
  %655 = vmatprep.subr.mxu0 0.0
  %656 = vmatpush1.msra.mxu0 0.0
  %657 = vmatprep.subr.mxu0 0.0
  %658 = vmatpush1.msra.mxu0 0.0
  %659 = vmatprep.subr.mxu0 0.0
  %660 = vmatpush1.msra.mxu0 0.0
  %661 = vmatprep.subr.mxu0 0.0
  %662 = vmatpush1.msra.mxu0 0.0
  %663 = vmatprep.subr.mxu0 0.0
  %664 = vmatpush1.msra.mxu0 0.0
  %665 = vmatprep.subr.mxu0 0.0
  %666 = vmatpush1.msra.mxu0 0.0
  %667 = vmatprep.subr.mxu0 0.0
  %668 = vmatpush1.msra.mxu0 0.0
  %669 = vmatprep.subr.mxu0 0.0
  %670 = vmatpush1.msra.mxu0 0.0
  %671 = vmatprep.mubr.f32.mxu0 0.0
  %672 = vmatmul.mubr.f32.gmra.mrb[0].mxu0 %v605
  %v673 = vpop.f32.mrb[0].mxu0
  %v674 = vadd.f32 0.0, %v673
  %v675 = vpop.f32.mrb[0].mxu0
  %676 = vdwg.mxu0
  %v677 = vadd.f32 %v172, %v674
  %v678 = vxor.u32 %v677, 2147483648
  %v679 = vmul.f32 %v678, 1.442695
  %v680 = vpow.pop %v679
  %v681 = vadd.f32 %v680, 1.0
  %v682 = vrcp.pop %v681
  %v683 = vmul.f32 1.0, %v682
  %v684 = vtanh.pop %v677
  %v685 = vmul.f32 %v683, %v492
  %687 = vrot.lane.b32.xlu0 %v684, 64
  %v688 = vpop.permute.xlu0 %687
  %v690 = vmul.f32 %v683, %v688
  %692 = vrot.lane.b32.xlu0 %v690, 32
  %v693 = vpop.permute.xlu0 %692
  %v695 = vadd.f32 %v685, %v693
  %v696 = vtanh.pop %v695
  %698 = vrot.lane.b32.xlu0 %v696, 64
  %v699 = vpop.permute.xlu0 %698
  %v701 = vmul.f32 %v683, %v699
  %703 = vrot.lane.b32.xlu0 %v701, 32
  %v704 = vpop.permute.xlu0 %703
  %707 = vrot.lane.b32.xlu0 %v604, 64
  %v708 = vpop.permute.xlu0 %707
  %v710 = vsel %vm200, %v704, %v708
  %v712 = vsel %vm304, %v710, 0
  %714 = vmatprep.subr.mxu0 0.0
  %715 = vmatpush1.msra.mxu0 %v35
  %716 = vmatprep.subr.mxu0 0.0
  %717 = vmatpush1.msra.mxu0 %v36
  %718 = vmatprep.subr.mxu0 0.0
  %719 = vmatpush1.msra.mxu0 %v37
  %720 = vmatprep.subr.mxu0 0.0
  %721 = vmatpush1.msra.mxu0 %v38
  %722 = vmatprep.subr.mxu0 0.0
  %723 = vmatpush1.msra.mxu0 %v39
  %724 = vmatprep.subr.mxu0 0.0
  %725 = vmatpush1.msra.mxu0 %v40
  %726 = vmatprep.subr.mxu0 0.0
  %727 = vmatpush1.msra.mxu0 %v41
  %728 = vmatprep.subr.mxu0 0.0
  %729 = vmatpush1.msra.mxu0 %v42
  %730 = vmatprep.subr.mxu0 0.0
  %731 = vmatpush1.msra.mxu0 0.0
  %732 = vmatprep.subr.mxu0 0.0
  %733 = vmatpush1.msra.mxu0 0.0
  %734 = vmatprep.subr.mxu0 0.0
  %735 = vmatpush1.msra.mxu0 0.0
  %736 = vmatprep.subr.mxu0 0.0
  %737 = vmatpush1.msra.mxu0 0.0
  %738 = vmatprep.subr.mxu0 0.0
  %739 = vmatpush1.msra.mxu0 0.0
  %740 = vmatprep.subr.mxu0 0.0
  %741 = vmatpush1.msra.mxu0 0.0
  %742 = vmatprep.subr.mxu0 0.0
  %743 = vmatpush1.msra.mxu0 0.0
  %744 = vmatprep.subr.mxu0 0.0
  %745 = vmatpush1.msra.mxu0 0.0
  %746 = vmatprep.subr.mxu0 0.0
  %747 = vmatpush1.msra.mxu0 0.0
  %748 = vmatprep.subr.mxu0 0.0
  %749 = vmatpush1.msra.mxu0 0.0
  %750 = vmatprep.subr.mxu0 0.0
  %751 = vmatpush1.msra.mxu0 0.0
  %752 = vmatprep.subr.mxu0 0.0
  %753 = vmatpush1.msra.mxu0 0.0
  %754 = vmatprep.subr.mxu0 0.0
  %755 = vmatpush1.msra.mxu0 0.0
  %756 = vmatprep.subr.mxu0 0.0
  %757 = vmatpush1.msra.mxu0 0.0
  %758 = vmatprep.subr.mxu0 0.0
  %759 = vmatpush1.msra.mxu0 0.0
  %760 = vmatprep.subr.mxu0 0.0
  %761 = vmatpush1.msra.mxu0 0.0
  %762 = vmatprep.subr.mxu0 0.0
  %763 = vmatpush1.msra.mxu0 0.0
  %764 = vmatprep.subr.mxu0 0.0
  %765 = vmatpush1.msra.mxu0 0.0
  %766 = vmatprep.subr.mxu0 0.0
  %767 = vmatpush1.msra.mxu0 0.0
  %768 = vmatprep.subr.mxu0 0.0
  %769 = vmatpush1.msra.mxu0 0.0
  %770 = vmatprep.subr.mxu0 0.0
  %771 = vmatpush1.msra.mxu0 0.0
  %772 = vmatprep.subr.mxu0 0.0
  %773 = vmatpush1.msra.mxu0 0.0
  %774 = vmatprep.subr.mxu0 0.0
  %775 = vmatpush1.msra.mxu0 0.0
  %776 = vmatprep.subr.mxu0 0.0
  %777 = vmatpush1.msra.mxu0 0.0
  %778 = vmatprep.mubr.f32.mxu0 0.0
  %779 = vmatmul.mubr.f32.gmra.mrb[0].mxu0 %v712
  %v780 = vpop.f32.mrb[0].mxu0
  %v781 = vadd.f32 %v48, %v780
  %v782 = vpop.f32.mrb[0].mxu0
  %783 = vdwg.mxu0
  %v784 = vxor.u32 %v781, 2147483648
  %v785 = vmul.f32 %v784, 1.442695
  %v786 = vpow.pop %v785
  %v787 = vadd.f32 %v786, 1.0
  %v788 = vrcp.pop %v787
  %v789 = vmul.f32 1.0, %v788
  %v790 = vtanh.pop %v781
  %v791 = vmul.f32 %v789, %v598
  %793 = vrot.lane.b32.xlu0 %v790, 64
  %v794 = vpop.permute.xlu0 %793
  %v796 = vmul.f32 %v789, %v794
  %798 = vrot.lane.b32.xlu0 %v796, 32
  %v799 = vpop.permute.xlu0 %798
  %v801 = vadd.f32 %v791, %v799
  %v802 = vtanh.pop %v801
  %804 = vrot.lane.b32.xlu0 %v802, 64
  %v805 = vpop.permute.xlu0 %804
  %v807 = vmul.f32 %v789, %v805
  %v808 = vsel %vm200, %v704, 0
  %810 = vmatprep.subr.mxu0 0.0
  %811 = vmatpush1.msra.mxu0 %v31
  %812 = vmatprep.subr.mxu0 0.0
  %813 = vmatpush1.msra.mxu0 %v32
  %814 = vmatprep.subr.mxu0 0.0
  %815 = vmatpush1.msra.mxu0 %v33
  %816 = vmatprep.subr.mxu0 0.0
  %817 = vmatpush1.msra.mxu0 %v34
  %818 = vmatprep.subr.mxu0 0.0
  %819 = vmatpush1.msra.mxu0 0.0
  %820 = vmatprep.subr.mxu0 0.0
  %821 = vmatpush1.msra.mxu0 0.0
  %822 = vmatprep.subr.mxu0 0.0
  %823 = vmatpush1.msra.mxu0 0.0
  %824 = vmatprep.subr.mxu0 0.0
  %825 = vmatpush1.msra.mxu0 0.0
  %826 = vmatprep.subr.mxu0 0.0
  %827 = vmatpush1.msra.mxu0 0.0
  %828 = vmatprep.subr.mxu0 0.0
  %829 = vmatpush1.msra.mxu0 0.0
  %830 = vmatprep.subr.mxu0 0.0
  %831 = vmatpush1.msra.mxu0 0.0
  %832 = vmatprep.subr.mxu0 0.0
  %833 = vmatpush1.msra.mxu0 0.0
  %834 = vmatprep.subr.mxu0 0.0
  %835 = vmatpush1.msra.mxu0 0.0
  %836 = vmatprep.subr.mxu0 0.0
  %837 = vmatpush1.msra.mxu0 0.0
  %838 = vmatprep.subr.mxu0 0.0
  %839 = vmatpush1.msra.mxu0 0.0
  %840 = vmatprep.subr.mxu0 0.0
  %841 = vmatpush1.msra.mxu0 0.0
  %842 = vmatprep.subr.mxu0 0.0
  %843 = vmatpush1.msra.mxu0 0.0
  %844 = vmatprep.subr.mxu0 0.0
  %845 = vmatpush1.msra.mxu0 0.0
  %846 = vmatprep.subr.mxu0 0.0
  %847 = vmatpush1.msra.mxu0 0.0
  %848 = vmatprep.subr.mxu0 0.0
  %849 = vmatpush1.msra.mxu0 0.0
  %850 = vmatprep.subr.mxu0 0.0
  %851 = vmatpush1.msra.mxu0 0.0
  %852 = vmatprep.subr.mxu0 0.0
  %853 = vmatpush1.msra.mxu0 0.0
  %854 = vmatprep.subr.mxu0 0.0
  %855 = vmatpush1.msra.mxu0 0.0
  %856 = vmatprep.subr.mxu0 0.0
  %857 = vmatpush1.msra.mxu0 0.0
  %858 = vmatprep.subr.mxu0 0.0
  %859 = vmatpush1.msra.mxu0 0.0
  %860 = vmatprep.subr.mxu0 0.0
  %861 = vmatpush1.msra.mxu0 0.0
  %862 = vmatprep.subr.mxu0 0.0
  %863 = vmatpush1.msra.mxu0 0.0
  %864 = vmatprep.subr.mxu0 0.0
  %865 = vmatpush1.msra.mxu0 0.0
  %866 = vmatprep.subr.mxu0 0.0
  %867 = vmatpush1.msra.mxu0 0.0
  %868 = vmatprep.subr.mxu0 0.0
  %869 = vmatpush1.msra.mxu0 0.0
  %870 = vmatprep.subr.mxu0 0.0
  %871 = vmatpush1.msra.mxu0 0.0
  %872 = vmatprep.subr.mxu0 0.0
  %873 = vmatpush1.msra.mxu0 0.0
  %874 = vmatprep.mubr.f32.mxu0 0.0
  %875 = vmatmul.mubr.f32.gmra.mrb[0].mxu0 %v808
  %v876 = vpop.f32.mrb[0].mxu0
  %v877 = vadd.f32 0.0, %v876
  %v878 = vpop.f32.mrb[0].mxu0
  %879 = vdwg.mxu0
  %v880 = vadd.f32 %v177, %v877
  %v881 = vxor.u32 %v880, 2147483648
  %v882 = vmul.f32 %v881, 1.442695
  %v883 = vpow.pop %v882
  %v884 = vadd.f32 %v883, 1.0
  %v885 = vrcp.pop %v884
  %v886 = vmul.f32 1.0, %v885
  %v887 = vtanh.pop %v880
  %v888 = vmul.f32 %v886, %v695
  %890 = vrot.lane.b32.xlu0 %v887, 64
  %v891 = vpop.permute.xlu0 %890
  %v893 = vmul.f32 %v886, %v891
  %895 = vrot.lane.b32.xlu0 %v893, 32
  %v896 = vpop.permute.xlu0 %895
  %v898 = vadd.f32 %v888, %v896
  %v899 = vtanh.pop %v898
  %901 = vrot.lane.b32.xlu0 %v899, 64
  %v902 = vpop.permute.xlu0 %901
  %v904 = vmul.f32 %v886, %v902
  %906 = vrot.lane.b32.xlu0 %v904, 32
  %v907 = vpop.permute.xlu0 %906
  %910 = vrot.lane.b32.xlu0 %v807, 64
  %v911 = vpop.permute.xlu0 %910
  %v913 = vsel %vm200, %v907, %v911
  %v915 = vsel %vm304, %v913, 0
  %917 = vmatprep.subr.mxu0 0.0
  %918 = vmatpush1.msra.mxu0 %v35
  %919 = vmatprep.subr.mxu0 0.0
  %920 = vmatpush1.msra.mxu0 %v36
  %921 = vmatprep.subr.mxu0 0.0
  %922 = vmatpush1.msra.mxu0 %v37
  %923 = vmatprep.subr.mxu0 0.0
  %924 = vmatpush1.msra.mxu0 %v38
  %925 = vmatprep.subr.mxu0 0.0
  %926 = vmatpush1.msra.mxu0 %v39
  %927 = vmatprep.subr.mxu0 0.0
  %928 = vmatpush1.msra.mxu0 %v40
  %929 = vmatprep.subr.mxu0 0.0
  %930 = vmatpush1.msra.mxu0 %v41
  %931 = vmatprep.subr.mxu0 0.0
  %932 = vmatpush1.msra.mxu0 %v42
  %933 = vmatprep.subr.mxu0 0.0
  %934 = vmatpush1.msra.mxu0 0.0
  %935 = vmatprep.subr.mxu0 0.0
  %936 = vmatpush1.msra.mxu0 0.0
  %937 = vmatprep.subr.mxu0 0.0
  %938 = vmatpush1.msra.mxu0 0.0
  %939 = vmatprep.subr.mxu0 0.0
  %940 = vmatpush1.msra.mxu0 0.0
  %941 = vmatprep.subr.mxu0 0.0
  %942 = vmatpush1.msra.mxu0 0.0
  %943 = vmatprep.subr.mxu0 0.0
  %944 = vmatpush1.msra.mxu0 0.0
  %945 = vmatprep.subr.mxu0 0.0
  %946 = vmatpush1.msra.mxu0 0.0
  %947 = vmatprep.subr.mxu0 0.0
  %948 = vmatpush1.msra.mxu0 0.0
  %949 = vmatprep.subr.mxu0 0.0
  %950 = vmatpush1.msra.mxu0 0.0
  %951 = vmatprep.subr.mxu0 0.0
  %952 = vmatpush1.msra.mxu0 0.0
  %953 = vmatprep.subr.mxu0 0.0
  %954 = vmatpush1.msra.mxu0 0.0
  %955 = vmatprep.subr.mxu0 0.0
  %956 = vmatpush1.msra.mxu0 0.0
  %957 = vmatprep.subr.mxu0 0.0
  %958 = vmatpush1.msra.mxu0 0.0
  %959 = vmatprep.subr.mxu0 0.0
  %960 = vmatpush1.msra.mxu0 0.0
  %961 = vmatprep.subr.mxu0 0.0
  %962 = vmatpush1.msra.mxu0 0.0
  %963 = vmatprep.subr.mxu0 0.0
  %964 = vmatpush1.msra.mxu0 0.0
  %965 = vmatprep.subr.mxu0 0.0
  %966 = vmatpush1.msra.mxu0 0.0
  %967 = vmatprep.subr.mxu0 0.0
  %968 = vmatpush1.msra.mxu0 0.0
  %969 = vmatprep.subr.mxu0 0.0
  %970 = vmatpush1.msra.mxu0 0.0
  %971 = vmatprep.subr.mxu0 0.0
  %972 = vmatpush1.msra.mxu0 0.0
  %973 = vmatprep.subr.mxu0 0.0
  %974 = vmatpush1.msra.mxu0 0.0
  %975 = vmatprep.subr.mxu0 0.0
  %976 = vmatpush1.msra.mxu0 0.0
  %977 = vmatprep.subr.mxu0 0.0
  %978 = vmatpush1.msra.mxu0 0.0
  %979 = vmatprep.subr.mxu0 0.0
  %980 = vmatpush1.msra.mxu0 0.0
  %981 = vmatprep.mubr.f32.mxu0 0.0
  %982 = vmatmul.mubr.f32.gmra.mrb[0].mxu0 %v915
  %v983 = vpop.f32.mrb[0].mxu0
  %v984 = vadd.f32 %v48, %v983
  %v985 = vpop.f32.mrb[0].mxu0
  %986 = vdwg.mxu0
  %v987 = vxor.u32 %v984, 2147483648
  %v988 = vmul.f32 %v987, 1.442695
  %v989 = vpow.pop %v988
  %v990 = vadd.f32 %v989, 1.0
  %v991 = vrcp.pop %v990
  %v992 = vmul.f32 1.0, %v991
  %v993 = vtanh.pop %v984
  %v994 = vmul.f32 %v992, %v801
  %996 = vrot.lane.b32.xlu0 %v993, 64
  %v997 = vpop.permute.xlu0 %996
  %v999 = vmul.f32 %v992, %v997
  %1001 = vrot.lane.b32.xlu0 %v999, 32
  %v1002 = vpop.permute.xlu0 %1001
  %v1004 = vadd.f32 %v994, %v1002
  %v1005 = vtanh.pop %v1004
  %1007 = vrot.lane.b32.xlu0 %v1005, 64
  %v1008 = vpop.permute.xlu0 %1007
  %v1010 = vmul.f32 %v992, %v1008
  %v1011 = vsel %vm200, %v907, 0
  %1013 = vmatprep.subr.mxu0 0.0
  %1014 = vmatpush1.msra.mxu0 %v31
  %1015 = vmatprep.subr.mxu0 0.0
  %1016 = vmatpush1.msra.mxu0 %v32
  %1017 = vmatprep.subr.mxu0 0.0
  %1018 = vmatpush1.msra.mxu0 %v33
  %1019 = vmatprep.subr.mxu0 0.0
  %1020 = vmatpush1.msra.mxu0 %v34
  %1021 = vmatprep.subr.mxu0 0.0
  %1022 = vmatpush1.msra.mxu0 0.0
  %1023 = vmatprep.subr.mxu0 0.0
  %1024 = vmatpush1.msra.mxu0 0.0
  %1025 = vmatprep.subr.mxu0 0.0
  %1026 = vmatpush1.msra.mxu0 0.0
  %1027 = vmatprep.subr.mxu0 0.0
  %1028 = vmatpush1.msra.mxu0 0.0
  %1029 = vmatprep.subr.mxu0 0.0
  %1030 = vmatpush1.msra.mxu0 0.0
  %1031 = vmatprep.subr.mxu0 0.0
  %1032 = vmatpush1.msra.mxu0 0.0
  %1033 = vmatprep.subr.mxu0 0.0
  %1034 = vmatpush1.msra.mxu0 0.0
  %1035 = vmatprep.subr.mxu0 0.0
  %1036 = vmatpush1.msra.mxu0 0.0
  %1037 = vmatprep.subr.mxu0 0.0
  %1038 = vmatpush1.msra.mxu0 0.0
  %1039 = vmatprep.subr.mxu0 0.0
  %1040 = vmatpush1.msra.mxu0 0.0
  %1041 = vmatprep.subr.mxu0 0.0
  %1042 = vmatpush1.msra.mxu0 0.0
  %1043 = vmatprep.subr.mxu0 0.0
  %1044 = vmatpush1.msra.mxu0 0.0
  %1045 = vmatprep.subr.mxu0 0.0
  %1046 = vmatpush1.msra.mxu0 0.0
  %1047 = vmatprep.subr.mxu0 0.0
  %1048 = vmatpush1.msra.mxu0 0.0
  %1049 = vmatprep.subr.mxu0 0.0
  %1050 = vmatpush1.msra.mxu0 0.0
  %1051 = vmatprep.subr.mxu0 0.0
  %1052 = vmatpush1.msra.mxu0 0.0
  %1053 = vmatprep.subr.mxu0 0.0
  %1054 = vmatpush1.msra.mxu0 0.0
  %1055 = vmatprep.subr.mxu0 0.0
  %1056 = vmatpush1.msra.mxu0 0.0
  %1057 = vmatprep.subr.mxu0 0.0
  %1058 = vmatpush1.msra.mxu0 0.0
  %1059 = vmatprep.subr.mxu0 0.0
  %1060 = vmatpush1.msra.mxu0 0.0
  %1061 = vmatprep.subr.mxu0 0.0
  %1062 = vmatpush1.msra.mxu0 0.0
  %1063 = vmatprep.subr.mxu0 0.0
  %1064 = vmatpush1.msra.mxu0 0.0
  %1065 = vmatprep.subr.mxu0 0.0
  %1066 = vmatpush1.msra.mxu0 0.0
  %1067 = vmatprep.subr.mxu0 0.0
  %1068 = vmatpush1.msra.mxu0 0.0
  %1069 = vmatprep.subr.mxu0 0.0
  %1070 = vmatpush1.msra.mxu0 0.0
  %1071 = vmatprep.subr.mxu0 0.0
  %1072 = vmatpush1.msra.mxu0 0.0
  %1073 = vmatprep.subr.mxu0 0.0
  %1074 = vmatpush1.msra.mxu0 0.0
  %1075 = vmatprep.subr.mxu0 0.0
  %1076 = vmatpush1.msra.mxu0 0.0
  %1077 = vmatprep.mubr.f32.mxu0 0.0
  %1078 = vmatmul.mubr.f32.gmra.mrb[0].mxu0 %v1011
  %v1079 = vpop.f32.mrb[0].mxu0
  %v1080 = vadd.f32 0.0, %v1079
  %v1081 = vpop.f32.mrb[0].mxu0
  %1082 = vdwg.mxu0
  %v1083 = vadd.f32 %v182, %v1080
  %v1084 = vxor.u32 %v1083, 2147483648
  %v1085 = vmul.f32 %v1084, 1.442695
  %v1086 = vpow.pop %v1085
  %v1087 = vadd.f32 %v1086, 1.0
  %v1088 = vrcp.pop %v1087
  %v1089 = vmul.f32 1.0, %v1088
  %v1090 = vtanh.pop %v1083
  %v1091 = vmul.f32 %v1089, %v898
  %1093 = vrot.lane.b32.xlu0 %v1090, 64
  %v1094 = vpop.permute.xlu0 %1093
  %v1096 = vmul.f32 %v1089, %v1094
  %1098 = vrot.lane.b32.xlu0 %v1096, 32
  %v1099 = vpop.permute.xlu0 %1098
  %v1101 = vadd.f32 %v1091, %v1099
  %v1102 = vtanh.pop %v1101
  %1104 = vrot.lane.b32.xlu0 %v1102, 64
  %v1105 = vpop.permute.xlu0 %1104
  %v1107 = vmul.f32 %v1089, %v1105
  %1109 = vrot.lane.b32.xlu0 %v1107, 32
  %v1110 = vpop.permute.xlu0 %1109
  %1113 = vrot.lane.b32.xlu0 %v1010, 64
  %v1114 = vpop.permute.xlu0 %1113
  %v1116 = vsel %vm200, %v1110, %v1114
  %v1118 = vsel %vm304, %v1116, 0
  %1120 = vmatprep.subr.mxu0 0.0
  %1121 = vmatpush1.msra.mxu0 %v35
  %1122 = vmatprep.subr.mxu0 0.0
  %1123 = vmatpush1.msra.mxu0 %v36
  %1124 = vmatprep.subr.mxu0 0.0
  %1125 = vmatpush1.msra.mxu0 %v37
  %1126 = vmatprep.subr.mxu0 0.0
  %1127 = vmatpush1.msra.mxu0 %v38
  %1128 = vmatprep.subr.mxu0 0.0
  %1129 = vmatpush1.msra.mxu0 %v39
  %1130 = vmatprep.subr.mxu0 0.0
  %1131 = vmatpush1.msra.mxu0 %v40
  %1132 = vmatprep.subr.mxu0 0.0
  %1133 = vmatpush1.msra.mxu0 %v41
  %1134 = vmatprep.subr.mxu0 0.0
  %1135 = vmatpush1.msra.mxu0 %v42
  %1136 = vmatprep.subr.mxu0 0.0
  %1137 = vmatpush1.msra.mxu0 0.0
  %1138 = vmatprep.subr.mxu0 0.0
  %1139 = vmatpush1.msra.mxu0 0.0
  %1140 = vmatprep.subr.mxu0 0.0
  %1141 = vmatpush1.msra.mxu0 0.0
  %1142 = vmatprep.subr.mxu0 0.0
  %1143 = vmatpush1.msra.mxu0 0.0
  %1144 = vmatprep.subr.mxu0 0.0
  %1145 = vmatpush1.msra.mxu0 0.0
  %1146 = vmatprep.subr.mxu0 0.0
  %1147 = vmatpush1.msra.mxu0 0.0
  %1148 = vmatprep.subr.mxu0 0.0
  %1149 = vmatpush1.msra.mxu0 0.0
  %1150 = vmatprep.subr.mxu0 0.0
  %1151 = vmatpush1.msra.mxu0 0.0
  %1152 = vmatprep.subr.mxu0 0.0
  %1153 = vmatpush1.msra.mxu0 0.0
  %1154 = vmatprep.subr.mxu0 0.0
  %1155 = vmatpush1.msra.mxu0 0.0
  %1156 = vmatprep.subr.mxu0 0.0
  %1157 = vmatpush1.msra.mxu0 0.0
  %1158 = vmatprep.subr.mxu0 0.0
  %1159 = vmatpush1.msra.mxu0 0.0
  %1160 = vmatprep.subr.mxu0 0.0
  %1161 = vmatpush1.msra.mxu0 0.0
  %1162 = vmatprep.subr.mxu0 0.0
  %1163 = vmatpush1.msra.mxu0 0.0
  %1164 = vmatprep.subr.mxu0 0.0
  %1165 = vmatpush1.msra.mxu0 0.0
  %1166 = vmatprep.subr.mxu0 0.0
  %1167 = vmatpush1.msra.mxu0 0.0
  %1168 = vmatprep.subr.mxu0 0.0
  %1169 = vmatpush1.msra.mxu0 0.0
  %1170 = vmatprep.subr.mxu0 0.0
  %1171 = vmatpush1.msra.mxu0 0.0
  %1172 = vmatprep.subr.mxu0 0.0
  %1173 = vmatpush1.msra.mxu0 0.0
  %1174 = vmatprep.subr.mxu0 0.0
  %1175 = vmatpush1.msra.mxu0 0.0
  %1176 = vmatprep.subr.mxu0 0.0
  %1177 = vmatpush1.msra.mxu0 0.0
  %1178 = vmatprep.subr.mxu0 0.0
  %1179 = vmatpush1.msra.mxu0 0.0
  %1180 = vmatprep.subr.mxu0 0.0
  %1181 = vmatpush1.msra.mxu0 0.0
  %1182 = vmatprep.subr.mxu0 0.0
  %1183 = vmatpush1.msra.mxu0 0.0
  %1184 = vmatprep.mubr.f32.mxu0 0.0
  %1185 = vmatmul.mubr.f32.gmra.mrb[0].mxu0 %v1118
  %v1186 = vpop.f32.mrb[0].mxu0
  %v1187 = vadd.f32 %v48, %v1186
  %v1188 = vpop.f32.mrb[0].mxu0
  %1189 = vdwg.mxu0
  %v1190 = vxor.u32 %v1187, 2147483648
  %v1191 = vmul.f32 %v1190, 1.442695
  %v1192 = vpow.pop %v1191
  %v1193 = vadd.f32 %v1192, 1.0
  %v1194 = vrcp.pop %v1193
  %v1195 = vmul.f32 1.0, %v1194
  %v1196 = vtanh.pop %v1187
  %v1197 = vmul.f32 %v1195, %v1004
  %1199 = vrot.lane.b32.xlu0 %v1196, 64
  %v1200 = vpop.permute.xlu0 %1199
  %v1202 = vmul.f32 %v1195, %v1200
  %1204 = vrot.lane.b32.xlu0 %v1202, 32
  %v1205 = vpop.permute.xlu0 %1204
  %v1207 = vadd.f32 %v1197, %v1205
  %v1208 = vtanh.pop %v1207
  %1210 = vrot.lane.b32.xlu0 %v1208, 64
  %v1211 = vpop.permute.xlu0 %1210
  %v1213 = vmul.f32 %v1195, %v1211
  %v1214 = vsel %vm200, %v1110, 0
  %1216 = vmatprep.subr.mxu0 0.0
  %1217 = vmatpush1.msra.mxu0 %v31
  %1218 = vmatprep.subr.mxu0 0.0
  %1219 = vmatpush1.msra.mxu0 %v32
  %1220 = vmatprep.subr.mxu0 0.0
  %1221 = vmatpush1.msra.mxu0 %v33
  %1222 = vmatprep.subr.mxu0 0.0
  %1223 = vmatpush1.msra.mxu0 %v34
  %1224 = vmatprep.subr.mxu0 0.0
  %1225 = vmatpush1.msra.mxu0 0.0
  %1226 = vmatprep.subr.mxu0 0.0
  %1227 = vmatpush1.msra.mxu0 0.0
  %1228 = vmatprep.subr.mxu0 0.0
  %1229 = vmatpush1.msra.mxu0 0.0
  %1230 = vmatprep.subr.mxu0 0.0
  %1231 = vmatpush1.msra.mxu0 0.0
  %1232 = vmatprep.subr.mxu0 0.0
  %1233 = vmatpush1.msra.mxu0 0.0
  %1234 = vmatprep.subr.mxu0 0.0
  %1235 = vmatpush1.msra.mxu0 0.0
  %1236 = vmatprep.subr.mxu0 0.0
  %1237 = vmatpush1.msra.mxu0 0.0
  %1238 = vmatprep.subr.mxu0 0.0
  %1239 = vmatpush1.msra.mxu0 0.0
  %1240 = vmatprep.subr.mxu0 0.0
  %1241 = vmatpush1.msra.mxu0 0.0
  %1242 = vmatprep.subr.mxu0 0.0
  %1243 = vmatpush1.msra.mxu0 0.0
  %1244 = vmatprep.subr.mxu0 0.0
  %1245 = vmatpush1.msra.mxu0 0.0
  %1246 = vmatprep.subr.mxu0 0.0
  %1247 = vmatpush1.msra.mxu0 0.0
  %1248 = vmatprep.subr.mxu0 0.0
  %1249 = vmatpush1.msra.mxu0 0.0
  %1250 = vmatprep.subr.mxu0 0.0
  %1251 = vmatpush1.msra.mxu0 0.0
  %1252 = vmatprep.subr.mxu0 0.0
  %1253 = vmatpush1.msra.mxu0 0.0
  %1254 = vmatprep.subr.mxu0 0.0
  %1255 = vmatpush1.msra.mxu0 0.0
  %1256 = vmatprep.subr.mxu0 0.0
  %1257 = vmatpush1.msra.mxu0 0.0
  %1258 = vmatprep.subr.mxu0 0.0
  %1259 = vmatpush1.msra.mxu0 0.0
  %1260 = vmatprep.subr.mxu0 0.0
  %1261 = vmatpush1.msra.mxu0 0.0
  %1262 = vmatprep.subr.mxu0 0.0
  %1263 = vmatpush1.msra.mxu0 0.0
  %1264 = vmatprep.subr.mxu0 0.0
  %1265 = vmatpush1.msra.mxu0 0.0
  %1266 = vmatprep.subr.mxu0 0.0
  %1267 = vmatpush1.msra.mxu0 0.0
  %1268 = vmatprep.subr.mxu0 0.0
  %1269 = vmatpush1.msra.mxu0 0.0
  %1270 = vmatprep.subr.mxu0 0.0
  %1271 = vmatpush1.msra.mxu0 0.0
  %1272 = vmatprep.subr.mxu0 0.0
  %1273 = vmatpush1.msra.mxu0 0.0
  %1274 = vmatprep.subr.mxu0 0.0
  %1275 = vmatpush1.msra.mxu0 0.0
  %1276 = vmatprep.subr.mxu0 0.0
  %1277 = vmatpush1.msra.mxu0 0.0
  %1278 = vmatprep.subr.mxu0 0.0
  %1279 = vmatpush1.msra.mxu0 0.0
  %1280 = vmatprep.mubr.f32.mxu0 0.0
  %1281 = vmatmul.mubr.f32.gmra.mrb[0].mxu0 %v1214
  %v1282 = vpop.f32.mrb[0].mxu0
  %v1283 = vadd.f32 0.0, %v1282
  %v1284 = vpop.f32.mrb[0].mxu0
  %1285 = vdwg.mxu0
  %v1286 = vadd.f32 %v187, %v1283
  %v1287 = vxor.u32 %v1286, 2147483648
  %v1288 = vmul.f32 %v1287, 1.442695
  %v1289 = vpow.pop %v1288
  %v1290 = vadd.f32 %v1289, 1.0
  %v1291 = vrcp.pop %v1290
  %v1292 = vmul.f32 1.0, %v1291
  %v1293 = vtanh.pop %v1286
  %v1294 = vmul.f32 %v1292, %v1101
  %1296 = vrot.lane.b32.xlu0 %v1293, 64
  %v1297 = vpop.permute.xlu0 %1296
  %v1299 = vmul.f32 %v1292, %v1297
  %1301 = vrot.lane.b32.xlu0 %v1299, 32
  %v1302 = vpop.permute.xlu0 %1301
  %v1304 = vadd.f32 %v1294, %v1302
  %v1305 = vtanh.pop %v1304
  %1307 = vrot.lane.b32.xlu0 %v1305, 64
  %v1308 = vpop.permute.xlu0 %1307
  %v1310 = vmul.f32 %v1292, %v1308
  %1312 = vrot.lane.b32.xlu0 %v1310, 32
  %v1313 = vpop.permute.xlu0 %1312
  %1316 = vrot.lane.b32.xlu0 %v1213, 64
  %v1317 = vpop.permute.xlu0 %1316
  %v1319 = vsel %vm200, %v1313, %v1317
  %v1321 = vsel %vm304, %v1319, 0
  %1323 = vmatprep.subr.mxu0 0.0
  %1324 = vmatpush1.msra.mxu0 %v35
  %1325 = vmatprep.subr.mxu0 0.0
  %1326 = vmatpush1.msra.mxu0 %v36
  %1327 = vmatprep.subr.mxu0 0.0
  %1328 = vmatpush1.msra.mxu0 %v37
  %1329 = vmatprep.subr.mxu0 0.0
  %1330 = vmatpush1.msra.mxu0 %v38
  %1331 = vmatprep.subr.mxu0 0.0
  %1332 = vmatpush1.msra.mxu0 %v39
  %1333 = vmatprep.subr.mxu0 0.0
  %1334 = vmatpush1.msra.mxu0 %v40
  %1335 = vmatprep.subr.mxu0 0.0
  %1336 = vmatpush1.msra.mxu0 %v41
  %1337 = vmatprep.subr.mxu0 0.0
  %1338 = vmatpush1.msra.mxu0 %v42
  %1339 = vmatprep.subr.mxu0 0.0
  %1340 = vmatpush1.msra.mxu0 0.0
  %1341 = vmatprep.subr.mxu0 0.0
  %1342 = vmatpush1.msra.mxu0 0.0
  %1343 = vmatprep.subr.mxu0 0.0
  %1344 = vmatpush1.msra.mxu0 0.0
  %1345 = vmatprep.subr.mxu0 0.0
  %1346 = vmatpush1.msra.mxu0 0.0
  %1347 = vmatprep.subr.mxu0 0.0
  %1348 = vmatpush1.msra.mxu0 0.0
  %1349 = vmatprep.subr.mxu0 0.0
  %1350 = vmatpush1.msra.mxu0 0.0
  %1351 = vmatprep.subr.mxu0 0.0
  %1352 = vmatpush1.msra.mxu0 0.0
  %1353 = vmatprep.subr.mxu0 0.0
  %1354 = vmatpush1.msra.mxu0 0.0
  %1355 = vmatprep.subr.mxu0 0.0
  %1356 = vmatpush1.msra.mxu0 0.0
  %1357 = vmatprep.subr.mxu0 0.0
  %1358 = vmatpush1.msra.mxu0 0.0
  %1359 = vmatprep.subr.mxu0 0.0
  %1360 = vmatpush1.msra.mxu0 0.0
  %1361 = vmatprep.subr.mxu0 0.0
  %1362 = vmatpush1.msra.mxu0 0.0
  %1363 = vmatprep.subr.mxu0 0.0
  %1364 = vmatpush1.msra.mxu0 0.0
  %1365 = vmatprep.subr.mxu0 0.0
  %1366 = vmatpush1.msra.mxu0 0.0
  %1367 = vmatprep.subr.mxu0 0.0
  %1368 = vmatpush1.msra.mxu0 0.0
  %1369 = vmatprep.subr.mxu0 0.0
  %1370 = vmatpush1.msra.mxu0 0.0
  %1371 = vmatprep.subr.mxu0 0.0
  %1372 = vmatpush1.msra.mxu0 0.0
  %1373 = vmatprep.subr.mxu0 0.0
  %1374 = vmatpush1.msra.mxu0 0.0
  %1375 = vmatprep.subr.mxu0 0.0
  %1376 = vmatpush1.msra.mxu0 0.0
  %1377 = vmatprep.subr.mxu0 0.0
  %1378 = vmatpush1.msra.mxu0 0.0
  %1379 = vmatprep.subr.mxu0 0.0
  %1380 = vmatpush1.msra.mxu0 0.0
  %1381 = vmatprep.subr.mxu0 0.0
  %1382 = vmatpush1.msra.mxu0 0.0
  %1383 = vmatprep.subr.mxu0 0.0
  %1384 = vmatpush1.msra.mxu0 0.0
  %1385 = vmatprep.subr.mxu0 0.0
  %1386 = vmatpush1.msra.mxu0 0.0
  %1387 = vmatprep.mubr.f32.mxu0 0.0
  %1388 = vmatmul.mubr.f32.gmra.mrb[0].mxu0 %v1321
  %v1389 = vpop.f32.mrb[0].mxu0
  %v1390 = vadd.f32 %v48, %v1389
  %v1391 = vpop.f32.mrb[0].mxu0
  %1392 = vdwg.mxu0
  %v1393 = vxor.u32 %v1390, 2147483648
  %v1394 = vmul.f32 %v1393, 1.442695
  %v1395 = vpow.pop %v1394
  %v1396 = vadd.f32 %v1395, 1.0
  %v1397 = vrcp.pop %v1396
  %v1398 = vmul.f32 1.0, %v1397
  %v1399 = vtanh.pop %v1390
  %v1400 = vmul.f32 %v1398, %v1207
  %1402 = vrot.lane.b32.xlu0 %v1399, 64
  %v1403 = vpop.permute.xlu0 %1402
  %v1405 = vmul.f32 %v1398, %v1403
  %1407 = vrot.lane.b32.xlu0 %v1405, 32
  %v1408 = vpop.permute.xlu0 %1407
  %v1410 = vadd.f32 %v1400, %v1408
  %v1411 = vtanh.pop %v1410
  %1413 = vrot.lane.b32.xlu0 %v1411, 64
  %v1414 = vpop.permute.xlu0 %1413
  %v1416 = vmul.f32 %v1398, %v1414
  %v1417 = vsel %vm200, %v1313, 0
  %1419 = vmatprep.subr.mxu0 0.0
  %1420 = vmatpush1.msra.mxu0 %v31
  %1421 = vmatprep.subr.mxu0 0.0
  %1422 = vmatpush1.msra.mxu0 %v32
  %1423 = vmatprep.subr.mxu0 0.0
  %1424 = vmatpush1.msra.mxu0 %v33
  %1425 = vmatprep.subr.mxu0 0.0
  %1426 = vmatpush1.msra.mxu0 %v34
  %1427 = vmatprep.subr.mxu0 0.0
  %1428 = vmatpush1.msra.mxu0 0.0
  %1429 = vmatprep.subr.mxu0 0.0
  %1430 = vmatpush1.msra.mxu0 0.0
  %1431 = vmatprep.subr.mxu0 0.0
  %1432 = vmatpush1.msra.mxu0 0.0
  %1433 = vmatprep.subr.mxu0 0.0
  %1434 = vmatpush1.msra.mxu0 0.0
  %1435 = vmatprep.subr.mxu0 0.0
  %1436 = vmatpush1.msra.mxu0 0.0
  %1437 = vmatprep.subr.mxu0 0.0
  %1438 = vmatpush1.msra.mxu0 0.0
  %1439 = vmatprep.subr.mxu0 0.0
  %1440 = vmatpush1.msra.mxu0 0.0
  %1441 = vmatprep.subr.mxu0 0.0
  %1442 = vmatpush1.msra.mxu0 0.0
  %1443 = vmatprep.subr.mxu0 0.0
  %1444 = vmatpush1.msra.mxu0 0.0
  %1445 = vmatprep.subr.mxu0 0.0
  %1446 = vmatpush1.msra.mxu0 0.0
  %1447 = vmatprep.subr.mxu0 0.0
  %1448 = vmatpush1.msra.mxu0 0.0
  %1449 = vmatprep.subr.mxu0 0.0
  %1450 = vmatpush1.msra.mxu0 0.0
  %1451 = vmatprep.subr.mxu0 0.0
  %1452 = vmatpush1.msra.mxu0 0.0
  %1453 = vmatprep.subr.mxu0 0.0
  %1454 = vmatpush1.msra.mxu0 0.0
  %1455 = vmatprep.subr.mxu0 0.0
  %1456 = vmatpush1.msra.mxu0 0.0
  %1457 = vmatprep.subr.mxu0 0.0
  %1458 = vmatpush1.msra.mxu0 0.0
  %1459 = vmatprep.subr.mxu0 0.0
  %1460 = vmatpush1.msra.mxu0 0.0
  %1461 = vmatprep.subr.mxu0 0.0
  %1462 = vmatpush1.msra.mxu0 0.0
  %1463 = vmatprep.subr.mxu0 0.0
  %1464 = vmatpush1.msra.mxu0 0.0
  %1465 = vmatprep.subr.mxu0 0.0
  %1466 = vmatpush1.msra.mxu0 0.0
  %1467 = vmatprep.subr.mxu0 0.0
  %1468 = vmatpush1.msra.mxu0 0.0
  %1469 = vmatprep.subr.mxu0 0.0
  %1470 = vmatpush1.msra.mxu0 0.0
  %1471 = vmatprep.subr.mxu0 0.0
  %1472 = vmatpush1.msra.mxu0 0.0
  %1473 = vmatprep.subr.mxu0 0.0
  %1474 = vmatpush1.msra.mxu0 0.0
  %1475 = vmatprep.subr.mxu0 0.0
  %1476 = vmatpush1.msra.mxu0 0.0
  %1477 = vmatprep.subr.mxu0 0.0
  %1478 = vmatpush1.msra.mxu0 0.0
  %1479 = vmatprep.subr.mxu0 0.0
  %1480 = vmatpush1.msra.mxu0 0.0
  %1481 = vmatprep.subr.mxu0 0.0
  %1482 = vmatpush1.msra.mxu0 0.0
  %1483 = vmatprep.mubr.f32.mxu0 0.0
  %1484 = vmatmul.mubr.f32.gmra.mrb[0].mxu0 %v1417
  %v1485 = vpop.f32.mrb[0].mxu0
  %v1486 = vadd.f32 0.0, %v1485
  %v1487 = vpop.f32.mrb[0].mxu0
  %1488 = vdwg.mxu0
  %v1489 = vadd.f32 %v192, %v1486
  %v1490 = vxor.u32 %v1489, 2147483648
  %v1491 = vmul.f32 %v1490, 1.442695
  %v1492 = vpow.pop %v1491
  %v1493 = vadd.f32 %v1492, 1.0
  %v1494 = vrcp.pop %v1493
  %v1495 = vmul.f32 1.0, %v1494
  %v1496 = vtanh.pop %v1489
  %v1497 = vmul.f32 %v1495, %v1304
  %1499 = vrot.lane.b32.xlu0 %v1496, 64
  %v1500 = vpop.permute.xlu0 %1499
  %v1502 = vmul.f32 %v1495, %v1500
  %1504 = vrot.lane.b32.xlu0 %v1502, 32
  %v1505 = vpop.permute.xlu0 %1504
  %v1507 = vadd.f32 %v1497, %v1505
  %v1508 = vtanh.pop %v1507
  %1510 = vrot.lane.b32.xlu0 %v1508, 64
  %v1511 = vpop.permute.xlu0 %1510
  %v1513 = vmul.f32 %v1495, %v1511
  %1515 = vrot.lane.b32.xlu0 %v1513, 32
  %v1516 = vpop.permute.xlu0 %1515
  %1519 = vrot.lane.b32.xlu0 %v1416, 64
  %v1520 = vpop.permute.xlu0 %1519
  %v1522 = vsel %vm200, %v1516, %v1520
  %v1524 = vsel %vm304, %v1522, 0
  %1526 = vmatprep.subr.mxu0 0.0
  %1527 = vmatpush1.msra.mxu0 %v35
  %1528 = vmatprep.subr.mxu0 0.0
  %1529 = vmatpush1.msra.mxu0 %v36
  %1530 = vmatprep.subr.mxu0 0.0
  %1531 = vmatpush1.msra.mxu0 %v37
  %1532 = vmatprep.subr.mxu0 0.0
  %1533 = vmatpush1.msra.mxu0 %v38
  %1534 = vmatprep.subr.mxu0 0.0
  %1535 = vmatpush1.msra.mxu0 %v39
  %1536 = vmatprep.subr.mxu0 0.0
  %1537 = vmatpush1.msra.mxu0 %v40
  %1538 = vmatprep.subr.mxu0 0.0
  %1539 = vmatpush1.msra.mxu0 %v41
  %1540 = vmatprep.subr.mxu0 0.0
  %1541 = vmatpush1.msra.mxu0 %v42
  %1542 = vmatprep.subr.mxu0 0.0
  %1543 = vmatpush1.msra.mxu0 0.0
  %1544 = vmatprep.subr.mxu0 0.0
  %1545 = vmatpush1.msra.mxu0 0.0
  %1546 = vmatprep.subr.mxu0 0.0
  %1547 = vmatpush1.msra.mxu0 0.0
  %1548 = vmatprep.subr.mxu0 0.0
  %1549 = vmatpush1.msra.mxu0 0.0
  %1550 = vmatprep.subr.mxu0 0.0
  %1551 = vmatpush1.msra.mxu0 0.0
  %1552 = vmatprep.subr.mxu0 0.0
  %1553 = vmatpush1.msra.mxu0 0.0
  %1554 = vmatprep.subr.mxu0 0.0
  %1555 = vmatpush1.msra.mxu0 0.0
  %1556 = vmatprep.subr.mxu0 0.0
  %1557 = vmatpush1.msra.mxu0 0.0
  %1558 = vmatprep.subr.mxu0 0.0
  %1559 = vmatpush1.msra.mxu0 0.0
  %1560 = vmatprep.subr.mxu0 0.0
  %1561 = vmatpush1.msra.mxu0 0.0
  %1562 = vmatprep.subr.mxu0 0.0
  %1563 = vmatpush1.msra.mxu0 0.0
  %1564 = vmatprep.subr.mxu0 0.0
  %1565 = vmatpush1.msra.mxu0 0.0
  %1566 = vmatprep.subr.mxu0 0.0
  %1567 = vmatpush1.msra.mxu0 0.0
  %1568 = vmatprep.subr.mxu0 0.0
  %1569 = vmatpush1.msra.mxu0 0.0
  %1570 = vmatprep.subr.mxu0 0.0
  %1571 = vmatpush1.msra.mxu0 0.0
  %1572 = vmatprep.subr.mxu0 0.0
  %1573 = vmatpush1.msra.mxu0 0.0
  %1574 = vmatprep.subr.mxu0 0.0
  %1575 = vmatpush1.msra.mxu0 0.0
  %1576 = vmatprep.subr.mxu0 0.0
  %1577 = vmatpush1.msra.mxu0 0.0
  %1578 = vmatprep.subr.mxu0 0.0
  %1579 = vmatpush1.msra.mxu0 0.0
  %1580 = vmatprep.subr.mxu0 0.0
  %1581 = vmatpush1.msra.mxu0 0.0
  %1582 = vmatprep.subr.mxu0 0.0
  %1583 = vmatpush1.msra.mxu0 0.0
  %1584 = vmatprep.subr.mxu0 0.0
  %1585 = vmatpush1.msra.mxu0 0.0
  %1586 = vmatprep.subr.mxu0 0.0
  %1587 = vmatpush1.msra.mxu0 0.0
  %1588 = vmatprep.subr.mxu0 0.0
  %1589 = vmatpush1.msra.mxu0 0.0
  %1590 = vmatprep.mubr.f32.mxu0 0.0
  %1591 = vmatmul.mubr.f32.gmra.mrb[0].mxu0 %v1524
  %v1592 = vpop.f32.mrb[0].mxu0
  %v1593 = vadd.f32 %v48, %v1592
  %v1594 = vpop.f32.mrb[0].mxu0
  %1595 = vdwg.mxu0
  %v1596 = vxor.u32 %v1593, 2147483648
  %v1597 = vmul.f32 %v1596, 1.442695
  %v1598 = vpow.pop %v1597
  %v1599 = vadd.f32 %v1598, 1.0
  %v1600 = vrcp.pop %v1599
  %v1601 = vmul.f32 1.0, %v1600
  %v1602 = vtanh.pop %v1593
  %v1603 = vmul.f32 %v1601, %v1410
  %1605 = vrot.lane.b32.xlu0 %v1602, 64
  %v1606 = vpop.permute.xlu0 %1605
  %v1608 = vmul.f32 %v1601, %v1606
  %1610 = vrot.lane.b32.xlu0 %v1608, 32
  %v1611 = vpop.permute.xlu0 %1610
  %v1613 = vadd.f32 %v1603, %v1611
  %v1614 = vtanh.pop %v1613
  %1616 = vrot.lane.b32.xlu0 %v1614, 64
  %v1617 = vpop.permute.xlu0 %1616
  %v1619 = vmul.f32 %v1601, %v1617
  %v1620 = vsel %vm200, %v1516, 0
  %1622 = vmatprep.subr.mxu0 0.0
  %1623 = vmatpush1.msra.mxu0 %v31
  %1624 = vmatprep.subr.mxu0 0.0
  %1625 = vmatpush1.msra.mxu0 %v32
  %1626 = vmatprep.subr.mxu0 0.0
  %1627 = vmatpush1.msra.mxu0 %v33
  %1628 = vmatprep.subr.mxu0 0.0
  %1629 = vmatpush1.msra.mxu0 %v34
  %1630 = vmatprep.subr.mxu0 0.0
  %1631 = vmatpush1.msra.mxu0 0.0
  %1632 = vmatprep.subr.mxu0 0.0
  %1633 = vmatpush1.msra.mxu0 0.0
  %1634 = vmatprep.subr.mxu0 0.0
  %1635 = vmatpush1.msra.mxu0 0.0
  %1636 = vmatprep.subr.mxu0 0.0
  %1637 = vmatpush1.msra.mxu0 0.0
  %1638 = vmatprep.subr.mxu0 0.0
  %1639 = vmatpush1.msra.mxu0 0.0
  %1640 = vmatprep.subr.mxu0 0.0
  %1641 = vmatpush1.msra.mxu0 0.0
  %1642 = vmatprep.subr.mxu0 0.0
  %1643 = vmatpush1.msra.mxu0 0.0
  %1644 = vmatprep.subr.mxu0 0.0
  %1645 = vmatpush1.msra.mxu0 0.0
  %1646 = vmatprep.subr.mxu0 0.0
  %1647 = vmatpush1.msra.mxu0 0.0
  %1648 = vmatprep.subr.mxu0 0.0
  %1649 = vmatpush1.msra.mxu0 0.0
  %1650 = vmatprep.subr.mxu0 0.0
  %1651 = vmatpush1.msra.mxu0 0.0
  %1652 = vmatprep.subr.mxu0 0.0
  %1653 = vmatpush1.msra.mxu0 0.0
  %1654 = vmatprep.subr.mxu0 0.0
  %1655 = vmatpush1.msra.mxu0 0.0
  %1656 = vmatprep.subr.mxu0 0.0
  %1657 = vmatpush1.msra.mxu0 0.0
  %1658 = vmatprep.subr.mxu0 0.0
  %1659 = vmatpush1.msra.mxu0 0.0
  %1660 = vmatprep.subr.mxu0 0.0
  %1661 = vmatpush1.msra.mxu0 0.0
  %1662 = vmatprep.subr.mxu0 0.0
  %1663 = vmatpush1.msra.mxu0 0.0
  %1664 = vmatprep.subr.mxu0 0.0
  %1665 = vmatpush1.msra.mxu0 0.0
  %1666 = vmatprep.subr.mxu0 0.0
  %1667 = vmatpush1.msra.mxu0 0.0
  %1668 = vmatprep.subr.mxu0 0.0
  %1669 = vmatpush1.msra.mxu0 0.0
  %1670 = vmatprep.subr.mxu0 0.0
  %1671 = vmatpush1.msra.mxu0 0.0
  %1672 = vmatprep.subr.mxu0 0.0
  %1673 = vmatpush1.msra.mxu0 0.0
  %1674 = vmatprep.subr.mxu0 0.0
  %1675 = vmatpush1.msra.mxu0 0.0
  %1676 = vmatprep.subr.mxu0 0.0
  %1677 = vmatpush1.msra.mxu0 0.0
  %1678 = vmatprep.subr.mxu0 0.0
  %1679 = vmatpush1.msra.mxu0 0.0
  %1680 = vmatprep.subr.mxu0 0.0
  %1681 = vmatpush1.msra.mxu0 0.0
  %1682 = vmatprep.subr.mxu0 0.0
  %1683 = vmatpush1.msra.mxu0 0.0
  %1684 = vmatprep.subr.mxu0 0.0
  %1685 = vmatpush1.msra.mxu0 0.0
  %1686 = vmatprep.mubr.f32.mxu0 0.0
  %1687 = vmatmul.mubr.f32.gmra.mrb[0].mxu0 %v1620
  %v1688 = vpop.f32.mrb[0].mxu0
  %v1689 = vadd.f32 0.0, %v1688
  %v1690 = vpop.f32.mrb[0].mxu0
  %1691 = vdwg.mxu0
  %v1692 = vadd.f32 %v197, %v1689
  %v1693 = vxor.u32 %v1692, 2147483648
  %v1694 = vmul.f32 %v1693, 1.442695
  %v1695 = vpow.pop %v1694
  %v1696 = vadd.f32 %v1695, 1.0
  %v1697 = vrcp.pop %v1696
  %v1698 = vmul.f32 1.0, %v1697
  %v1699 = vtanh.pop %v1692
  %v1700 = vmul.f32 %v1698, %v1507
  %1702 = vrot.lane.b32.xlu0 %v1699, 64
  %v1703 = vpop.permute.xlu0 %1702
  %v1705 = vmul.f32 %v1698, %v1703
  %1707 = vrot.lane.b32.xlu0 %v1705, 32
  %v1708 = vpop.permute.xlu0 %1707
  %v1710 = vadd.f32 %v1700, %v1708
  %v1711 = vtanh.pop %v1710
  %1713 = vrot.lane.b32.xlu0 %v1711, 64
  %v1714 = vpop.permute.xlu0 %1713
  %v1716 = vmul.f32 %v1698, %v1714
  %1718 = vrot.lane.b32.xlu0 %v1716, 32
  %v1719 = vpop.permute.xlu0 %1718
  %1722 = vrot.lane.b32.xlu0 %v1619, 64
  %v1723 = vpop.permute.xlu0 %1722
  %v1725 = vsel %vm200, %v1719, %v1723
  %v1727 = vsel %vm304, %v1725, 0
  %1729 = vmatprep.subr.mxu0 0.0
  %1730 = vmatpush1.msra.mxu0 %v35
  %1731 = vmatprep.subr.mxu0 0.0
  %1732 = vmatpush1.msra.mxu0 %v36
  %1733 = vmatprep.subr.mxu0 0.0
  %1734 = vmatpush1.msra.mxu0 %v37
  %1735 = vmatprep.subr.mxu0 0.0
  %1736 = vmatpush1.msra.mxu0 %v38
  %1737 = vmatprep.subr.mxu0 0.0
  %1738 = vmatpush1.msra.mxu0 %v39
  %1739 = vmatprep.subr.mxu0 0.0
  %1740 = vmatpush1.msra.mxu0 %v40
  %1741 = vmatprep.subr.mxu0 0.0
  %1742 = vmatpush1.msra.mxu0 %v41
  %1743 = vmatprep.subr.mxu0 0.0
  %1744 = vmatpush1.msra.mxu0 %v42
  %1745 = vmatprep.subr.mxu0 0.0
  %1746 = vmatpush1.msra.mxu0 0.0
  %1747 = vmatprep.subr.mxu0 0.0
  %1748 = vmatpush1.msra.mxu0 0.0
  %1749 = vmatprep.subr.mxu0 0.0
  %1750 = vmatpush1.msra.mxu0 0.0
  %1751 = vmatprep.subr.mxu0 0.0
  %1752 = vmatpush1.msra.mxu0 0.0
  %1753 = vmatprep.subr.mxu0 0.0
  %1754 = vmatpush1.msra.mxu0 0.0
  %1755 = vmatprep.subr.mxu0 0.0
  %1756 = vmatpush1.msra.mxu0 0.0
  %1757 = vmatprep.subr.mxu0 0.0
  %1758 = vmatpush1.msra.mxu0 0.0
  %1759 = vmatprep.subr.mxu0 0.0
  %1760 = vmatpush1.msra.mxu0 0.0
  %1761 = vmatprep.subr.mxu0 0.0
  %1762 = vmatpush1.msra.mxu0 0.0
  %1763 = vmatprep.subr.mxu0 0.0
  %1764 = vmatpush1.msra.mxu0 0.0
  %1765 = vmatprep.subr.mxu0 0.0
  %1766 = vmatpush1.msra.mxu0 0.0
  %1767 = vmatprep.subr.mxu0 0.0
  %1768 = vmatpush1.msra.mxu0 0.0
  %1769 = vmatprep.subr.mxu0 0.0
  %1770 = vmatpush1.msra.mxu0 0.0
  %1771 = vmatprep.subr.mxu0 0.0
  %1772 = vmatpush1.msra.mxu0 0.0
  %1773 = vmatprep.subr.mxu0 0.0
  %1774 = vmatpush1.msra.mxu0 0.0
  %1775 = vmatprep.subr.mxu0 0.0
  %1776 = vmatpush1.msra.mxu0 0.0
  %1777 = vmatprep.subr.mxu0 0.0
  %1778 = vmatpush1.msra.mxu0 0.0
  %1779 = vmatprep.subr.mxu0 0.0
  %1780 = vmatpush1.msra.mxu0 0.0
  %1781 = vmatprep.subr.mxu0 0.0
  %1782 = vmatpush1.msra.mxu0 0.0
  %1783 = vmatprep.subr.mxu0 0.0
  %1784 = vmatpush1.msra.mxu0 0.0
  %1785 = vmatprep.subr.mxu0 0.0
  %1786 = vmatpush1.msra.mxu0 0.0
  %1787 = vmatprep.subr.mxu0 0.0
  %1788 = vmatpush1.msra.mxu0 0.0
  %1789 = vmatprep.subr.mxu0 0.0
  %1790 = vmatpush1.msra.mxu0 0.0
  %1791 = vmatprep.subr.mxu0 0.0
  %1792 = vmatpush1.msra.mxu0 0.0
  %1793 = vmatprep.mubr.f32.mxu0 0.0
  %1794 = vmatmul.mubr.f32.gmra.mrb[0].mxu0 %v1727
  %v1795 = vpop.f32.mrb[0].mxu0
  %v1796 = vadd.f32 %v48, %v1795
  %v1797 = vpop.f32.mrb[0].mxu0
  %1798 = vdwg.mxu0
  %v1799 = vxor.u32 %v1796, 2147483648
  %v1800 = vmul.f32 %v1799, 1.442695
  %v1801 = vpow.pop %v1800
  %v1802 = vadd.f32 %v1801, 1.0
  %v1803 = vrcp.pop %v1802
  %v1804 = vmul.f32 1.0, %v1803
  %v1805 = vtanh.pop %v1796
  %v1806 = vmul.f32 %v1804, %v1613
  %1808 = vrot.lane.b32.xlu0 %v1805, 64
  %v1809 = vpop.permute.xlu0 %1808
  %v1811 = vmul.f32 %v1804, %v1809
  %1813 = vrot.lane.b32.xlu0 %v1811, 32
  %v1814 = vpop.permute.xlu0 %1813
  %v1816 = vadd.f32 %v1806, %v1814
  %v1817 = vtanh.pop %v1816
  %1819 = vrot.lane.b32.xlu0 %v1817, 64
  %v1820 = vpop.permute.xlu0 %1819
  %v1822 = vmul.f32 %v1804, %v1820
  %v1823 = vld [vmem:[%s6] sm:$0xff]
  %v1824 = vld [vmem:[%s6 + $0x8] sm:$0xff]
  %v1825 = vld [vmem:[%s6 + $0x10] sm:$0xff]
  %v1826 = vld [vmem:[%s6 + $0x18] sm:$0xff]
  %v1827 = vld [vmem:[#allocation2] sm:$0x1]
  %v1829 = vlaneseq
  %v1830 = vshrl.u32 %v1829, 7
  %v1831 = vsub.s32 0, %v1830
  %v1832 = vrot.slane %v1827, %v1831
  %1835 = vrot.lane.b32.xlu0 %v1822, 32
  %v1836 = vpop.permute.xlu0 %1835
  %v1837 = vsel %vm200, %v1836, 0
  %1839 = vmatprep.subr.mxu0 0.0
  %1840 = vmatpush1.msra.mxu0 %v1823
  %1841 = vmatprep.subr.mxu0 0.0
  %1842 = vmatpush1.msra.mxu0 %v1824
  %1843 = vmatprep.subr.mxu0 0.0
  %1844 = vmatpush1.msra.mxu0 %v1825
  %1845 = vmatprep.subr.mxu0 0.0
  %1846 = vmatpush1.msra.mxu0 %v1826
  %1847 = vmatprep.subr.mxu0 0.0
  %1848 = vmatpush1.msra.mxu0 0.0
  %1849 = vmatprep.subr.mxu0 0.0
  %1850 = vmatpush1.msra.mxu0 0.0
  %1851 = vmatprep.subr.mxu0 0.0
  %1852 = vmatpush1.msra.mxu0 0.0
  %1853 = vmatprep.subr.mxu0 0.0
  %1854 = vmatpush1.msra.mxu0 0.0
  %1855 = vmatprep.subr.mxu0 0.0
  %1856 = vmatpush1.msra.mxu0 0.0
  %1857 = vmatprep.subr.mxu0 0.0
  %1858 = vmatpush1.msra.mxu0 0.0
  %1859 = vmatprep.subr.mxu0 0.0
  %1860 = vmatpush1.msra.mxu0 0.0
  %1861 = vmatprep.subr.mxu0 0.0
  %1862 = vmatpush1.msra.mxu0 0.0
  %1863 = vmatprep.subr.mxu0 0.0
  %1864 = vmatpush1.msra.mxu0 0.0
  %1865 = vmatprep.subr.mxu0 0.0
  %1866 = vmatpush1.msra.mxu0 0.0
  %1867 = vmatprep.subr.mxu0 0.0
  %1868 = vmatpush1.msra.mxu0 0.0
  %1869 = vmatprep.subr.mxu0 0.0
  %1870 = vmatpush1.msra.mxu0 0.0
  %1871 = vmatprep.subr.mxu0 0.0
  %1872 = vmatpush1.msra.mxu0 0.0
  %1873 = vmatprep.subr.mxu0 0.0
  %1874 = vmatpush1.msra.mxu0 0.0
  %1875 = vmatprep.subr.mxu0 0.0
  %1876 = vmatpush1.msra.mxu0 0.0
  %1877 = vmatprep.subr.mxu0 0.0
  %1878 = vmatpush1.msra.mxu0 0.0
  %1879 = vmatprep.subr.mxu0 0.0
  %1880 = vmatpush1.msra.mxu0 0.0
  %1881 = vmatprep.subr.mxu0 0.0
  %1882 = vmatpush1.msra.mxu0 0.0
  %1883 = vmatprep.subr.mxu0 0.0
  %1884 = vmatpush1.msra.mxu0 0.0
  %1885 = vmatprep.subr.mxu0 0.0
  %1886 = vmatpush1.msra.mxu0 0.0
  %1887 = vmatprep.subr.mxu0 0.0
  %1888 = vmatpush1.msra.mxu0 0.0
  %1889 = vmatprep.subr.mxu0 0.0
  %1890 = vmatpush1.msra.mxu0 0.0
  %1891 = vmatprep.subr.mxu0 0.0
  %1892 = vmatpush1.msra.mxu0 0.0
  %1893 = vmatprep.subr.mxu0 0.0
  %1894 = vmatpush1.msra.mxu0 0.0
  %1895 = vmatprep.subr.mxu0 0.0
  %1896 = vmatpush1.msra.mxu0 0.0
  %1897 = vmatprep.subr.mxu0 0.0
  %1898 = vmatpush1.msra.mxu0 0.0
  %1899 = vmatprep.subr.mxu0 0.0
  %1900 = vmatpush1.msra.mxu0 0.0
  %1901 = vmatprep.subr.mxu0 0.0
  %1902 = vmatpush1.msra.mxu0 0.0
  %1903 = vmatprep.mubr.f32.mxu0 0.0
  %1904 = vmatmul.mubr.f32.gmra.mrb[0].mxu0 %v1837
  %v1905 = vpop.f32.mrb[0].mxu0
  %v1906 = vadd.f32 %v1832, %v1905
  %v1907 = vpop.f32.mrb[0].mxu0
  %1908 = vdwg.mxu0
  %vm1909 = vcmask 7168
  %1910 = vst.msk [vmem:[%s8] sm:$0xff] %vm1909, %v1906
  // Predicated region
  $region34: #{stock_lstm_forward.1} parent=0 // pred_check
    _
  $region35: #{stock_lstm_forward.1} parent=0 // pred_check_branch
    %1912 = sbr.rel (0) target = $region37
  $region36: #{stock_lstm_forward.1} parent=0 // pred_region
    _
  $region37: #{stock_lstm_forward.1} parent=0 // pred_fallthru
    _
  // Predicated region
  $region38: #{stock_lstm_forward.1} parent=0 // pred_check
    _
  $region39: #{stock_lstm_forward.1} parent=0 // pred_check_branch
    %1914 = sbr.rel (0) target = $region41
  $region40: #{stock_lstm_forward.1} parent=0 // pred_region
    _
  $region41: #{stock_lstm_forward.1} parent=0 // pred_fallthru
    _

</llo_original>
